<compile_context>
chip_gen: v6e
topology: v6e:2x2x1
jax: 0.10.0
libtpu: 0.0.40
codegen_flags: <defaults>
</compile_context>

<pallas_src>
import math

import jax
import jax.numpy as jnp
from jax.experimental import pallas as pl
from jax.experimental.pallas import tpu as pltpu

# ---------------- model config (small, consistent with the module) ----------
B = 2            # batch
S = 8            # sequence length
H = 32           # hidden_size (768 in the real module)
NUM_HEADS = 2
DH = H // NUM_HEADS
I = 64           # FFN intermediate size
C = 7            # num_classes
V = 50           # vocab size (synthetic)
LN_EPS = 1e-12
LANE = 128       # lane width / padded output width
N_VEC_ROWS = 16  # packed bias/LN table rows (12 used, padded to 16 sublanes)

# rows of the packed (N_VEC_ROWS, LANE) bias / LayerNorm parameter table
R_LNE_G, R_LNE_B = 0, 1
R_BQKV = 2
R_BO = 3
R_LN1_G, R_LN1_B = 4, 5
R_B1 = 6
R_B2 = 7
R_LN2_G, R_LN2_B = 8, 9
R_BP = 10
R_BC = 11


def _gelu(x):
    # TODO(synk): PyTorch/HF BERT's default GELU is the exact erf form; the
    # tanh approximation is used here (matches gelu(approximate="tanh")).
    return 0.5 * x * (1.0 + jnp.tanh(0.7978845608028654 * (x + 0.044715 * x * x * x)))


def bert_classifier_kernel(
    # scalar prefetch
    vlen_ref,                   # (B,) int32 valid lengths (SMEM)
    # tensor inputs
    x_ref,                      # (B, S, H) embedded tokens
    vecs_ref,                   # (N_VEC_ROWS, LANE) packed biases / LN params
    wqkv_ref,                   # (H, 3H) fused Q|K|V projection weight
    wo_ref,                     # (H, H) attention output projection
    w1_ref,                     # (H, I) FFN in
    w2_ref,                     # (I, H) FFN out
    wp_ref,                     # (H, H) pooler
    wc_ref,                     # (H, LANE) classifier weight (lane-padded)
    # output
    out_ref,                    # (B, LANE) lane-padded logits
):
    vecs = vecs_ref[...]
    lne_g = vecs[R_LNE_G:R_LNE_G + 1, 0:H]
    lne_b = vecs[R_LNE_B:R_LNE_B + 1, 0:H]
    bqkv = vecs[R_BQKV:R_BQKV + 1, 0:3 * H]
    bo = vecs[R_BO:R_BO + 1, 0:H]
    ln1_g = vecs[R_LN1_G:R_LN1_G + 1, 0:H]
    ln1_b = vecs[R_LN1_B:R_LN1_B + 1, 0:H]
    b1 = vecs[R_B1:R_B1 + 1, 0:I]
    b2 = vecs[R_B2:R_B2 + 1, 0:H]
    ln2_g = vecs[R_LN2_G:R_LN2_G + 1, 0:H]
    ln2_b = vecs[R_LN2_B:R_LN2_B + 1, 0:H]
    bp = vecs[R_BP:R_BP + 1, 0:H]
    bc = vecs[R_BC:R_BC + 1, :]             # already zero-padded to LANE

    def layer_norm(h, g, beta):
        mu = jnp.mean(h, axis=-1, keepdims=True)
        d = h - mu
        var = jnp.mean(d * d, axis=-1, keepdims=True)
        return d * jax.lax.rsqrt(var + LN_EPS) * g + beta

    # whole batch in one step: flatten to (B*S, H) rows (16 sublanes of work)
    x = x_ref[...].reshape(B * S, H)

    # ---- gen_attention_mask: additive key bias per batch from valid_length --
    key_pos = jax.lax.broadcasted_iota(jnp.int32, (1, 1, S), 2)          # (1,1,S)
    vlen_b = jnp.concatenate(
        [vlen_ref[i] + jnp.zeros((1, 1, S), jnp.int32) for i in range(B)], axis=0)
    neg_bias = jnp.where(key_pos < vlen_b, 0.0, -1e9)                    # (B,1,S)

    # ---- embedding LayerNorm -------------------------------------------------
    h = layer_norm(x, lne_g, lne_b)

    # ---- multi-head self-attention (fused QKV, batched over B) --------------
    qkv = jnp.dot(h, wqkv_ref[...], preferred_element_type=jnp.float32) + bqkv
    q = qkv[:, 0:H].reshape(B, S, H)
    k = qkv[:, H:2 * H].reshape(B, S, H)
    v = qkv[:, 2 * H:3 * H].reshape(B, S, H)

    scale = 1.0 / math.sqrt(DH)
    wo = wo_ref[...]
    attn_acc = jnp.zeros((B * S, H), jnp.float32)
    for hh in range(NUM_HEADS):              # static 2-iteration loop
        lo, hi = hh * DH, (hh + 1) * DH
        qs, ks, vs = q[:, :, lo:hi], k[:, :, lo:hi], v[:, :, lo:hi]
        scores = jnp.einsum("bqd,bkd->bqk", qs, ks,
                            preferred_element_type=jnp.float32) * scale
        scores = scores + neg_bias           # broadcast over query rows
        m = jnp.max(scores, axis=-1, keepdims=True)
        e = jnp.exp(scores - m)
        denom = jnp.sum(e, axis=-1, keepdims=True)
        p = e * pl.reciprocal(denom, approx=True)
        ctx = jnp.einsum("bqk,bkd->bqd", p, vs,
                         preferred_element_type=jnp.float32)             # (B,S,DH)
        # project this head through its row-block of Wo and accumulate:
        # avoids a cross-lane concatenate of head outputs.
        attn_acc = attn_acc + jnp.dot(ctx.reshape(B * S, DH), wo[lo:hi, :],
                                      preferred_element_type=jnp.float32)

    attn_out = attn_acc + bo
    h1 = layer_norm(h + attn_out, ln1_g, ln1_b)

    # ---- feed-forward (GELU) --------------------------------------------------
    ff = jnp.dot(h1, w1_ref[...], preferred_element_type=jnp.float32) + b1
    ff = _gelu(ff)
    ff = jnp.dot(ff, w2_ref[...], preferred_element_type=jnp.float32) + b2
    h2 = layer_norm(h1 + ff, ln2_g, ln2_b)

    # ---- BERT pooler: tanh(dense(hidden[:, 0])) over every batch element -----
    cls = jnp.concatenate([h2[i * S:i * S + 1, :] for i in range(B)], axis=0)  # (B,H)
    pooled = jnp.tanh(
        jnp.dot(cls, wp_ref[...], preferred_element_type=jnp.float32) + bp)

    # TODO(synk): nn.Dropout(p=dr_rate) is identity at inference; train-mode
    # stochastic dropout is not reproduced here.

    # ---- classifier: lane-padded (B, 128) store (unmasked vst) ----------------
    logits = jnp.dot(pooled, wc_ref[...], preferred_element_type=jnp.float32) + bc
    out_ref[...] = logits


def bert_classifier_forward(token_ids, valid_length, segment_ids, params):
    """Plain-JAX glue (embedding gather + param packing) + single Pallas call."""
    # Embedding lookups (gather) — glue outside the kernel.
    pos_ids = jnp.arange(S, dtype=jnp.int32)
    x_emb = (params["word_emb"][token_ids]
             + params["pos_emb"][pos_ids][None, :, :]
             + params["type_emb"][segment_ids]).astype(jnp.float32)   # (B, S, H)

    # Fused QKV weight and lane-padded classifier weight.
    wqkv = jnp.concatenate([params["wq"], params["wk"], params["wv"]], axis=1)  # (H,3H)
    wc_pad = jnp.pad(params["wc"], ((0, 0), (0, LANE - C)))                     # (H,128)

    # Pack all bias / LayerNorm vectors into one (N_VEC_ROWS, 128) table.
    def _row(vec):
        vec = vec.reshape(-1).astype(jnp.float32)
        return jnp.pad(vec, (0, LANE - vec.shape[0]))

    bqkv = jnp.concatenate([params["bq"], params["bk"], params["bv"]], axis=1)
    vec_rows = [params["lne_g"], params["lne_b"], bqkv, params["bo"],
                params["ln1_g"], params["ln1_b"], params["b1"], params["b2"],
                params["ln2_g"], params["ln2_b"], params["bp"], params["bc"]]
    vecs = jnp.stack([_row(v) for v in vec_rows])                       # (12, 128)
    vecs = jnp.pad(vecs, ((0, N_VEC_ROWS - vecs.shape[0]), (0, 0)))     # (16, 128)

    def _full(shape):
        nd = len(shape)
        return pl.BlockSpec(shape, lambda i, vl, nd=nd: (0,) * nd)

    grid_spec = pltpu.PrefetchScalarGridSpec(
        num_scalar_prefetch=1,
        grid=(1,),                                   # single step: whole batch at once
        in_specs=[
            _full((B, S, H)),                        # x_emb
            _full((N_VEC_ROWS, LANE)),               # packed biases / LN params
            _full((H, 3 * H)),                       # fused Wqkv
            _full((H, H)),                           # Wo
            _full((H, I)),                           # W1
            _full((I, H)),                           # W2
            _full((H, H)),                           # pooler W
            _full((H, LANE)),                        # classifier W (padded)
        ],
        out_specs=pl.BlockSpec((B, LANE), lambda i, vl: (0, 0)),
    )

    out_pad = pl.pallas_call(
        bert_classifier_kernel,
        out_shape=jax.ShapeDtypeStruct((B, LANE), jnp.float32),
        grid_spec=grid_spec,
        compiler_params=pltpu.CompilerParams(
            dimension_semantics=("arbitrary",)),
    )(
        valid_length.astype(jnp.int32),
        x_emb, vecs, wqkv,
        params["wo"], params["w1"], params["w2"], params["wp"], wc_pad,
    )
    return out_pad[:, :C]                            # (B, C) logits


def init_params(key):
    ks = jax.random.split(key, 16)
    std = 0.02
    p = {
        "word_emb": jax.random.normal(ks[0], (V, H), jnp.float32) * std,
        "pos_emb":  jax.random.normal(ks[1], (S, H), jnp.float32) * std,
        "type_emb": jax.random.normal(ks[2], (2, H), jnp.float32) * std,
        "lne_g": jnp.ones((1, H), jnp.float32), "lne_b": jnp.zeros((1, H), jnp.float32),
        "wq": jax.random.normal(ks[3], (H, H), jnp.float32) * std,
        "bq": jnp.zeros((1, H), jnp.float32),
        "wk": jax.random.normal(ks[4], (H, H), jnp.float32) * std,
        "bk": jnp.zeros((1, H), jnp.float32),
        "wv": jax.random.normal(ks[5], (H, H), jnp.float32) * std,
        "bv": jnp.zeros((1, H), jnp.float32),
        "wo": jax.random.normal(ks[6], (H, H), jnp.float32) * std,
        "bo": jnp.zeros((1, H), jnp.float32),
        "ln1_g": jnp.ones((1, H), jnp.float32), "ln1_b": jnp.zeros((1, H), jnp.float32),
        "w1": jax.random.normal(ks[7], (H, I), jnp.float32) * std,
        "b1": jnp.zeros((1, I), jnp.float32),
        "w2": jax.random.normal(ks[8], (I, H), jnp.float32) * std,
        "b2": jnp.zeros((1, H), jnp.float32),
        "ln2_g": jnp.ones((1, H), jnp.float32), "ln2_b": jnp.zeros((1, H), jnp.float32),
        "wp": jax.random.normal(ks[9], (H, H), jnp.float32) * std,
        "bp": jnp.zeros((1, H), jnp.float32),
        "wc": jax.random.normal(ks[10], (H, C), jnp.float32) * std,
        "bc": jnp.zeros((1, C), jnp.float32),
    }
    return p


if __name__ == "__main__":
    key = jax.random.PRNGKey(0)
    pkey, tkey, skey = jax.random.split(key, 3)

    params = init_params(pkey)
    token_ids = jax.random.randint(tkey, (B, S), 0, V, dtype=jnp.int32)
    segment_ids = jnp.zeros((B, S), dtype=jnp.int32)
    valid_length = jnp.array([5, 8], dtype=jnp.int32)   # per-example valid lengths

    logits = bert_classifier_forward(token_ids, valid_length, segment_ids, params)
    logits = jax.block_until_ready(logits)
    assert logits.shape == (B, C) and logits.dtype == jnp.float32
    print("KERNEL_OK")
</pallas_src>

<mosaic_0001>
module attributes {stable_mosaic.version = 11 : i64} {
  func.func @bert_classifier_kernel(%arg0: i32, %arg1: memref<2xi32, #tpu.memory_space<smem>>, %arg2: memref<2x8x32xf32, #tpu.memory_space<vmem>>, %arg3: memref<16x128xf32, #tpu.memory_space<vmem>>, %arg4: memref<32x96xf32, #tpu.memory_space<vmem>>, %arg5: memref<32x32xf32, #tpu.memory_space<vmem>>, %arg6: memref<32x64xf32, #tpu.memory_space<vmem>>, %arg7: memref<64x32xf32, #tpu.memory_space<vmem>>, %arg8: memref<32x32xf32, #tpu.memory_space<vmem>>, %arg9: memref<32x128xf32, #tpu.memory_space<vmem>>, %arg10: memref<2x128xf32, #tpu.memory_space<vmem>>) attributes {dimension_semantics = [#tpu.dimension_semantics<arbitrary>], iteration_bounds = array<i64: 1>, scalar_prefetch = 1 : i64, scratch_operands = 0 : i64, tpu.core_type = #tpu.core_type<tc>, window_params = [{pipeline_mode = #tpu.pipeline_mode<synchronous>, transform_indices = @transform_0, window_bounds = array<i64: 2, 8, 32>}, {pipeline_mode = #tpu.pipeline_mode<synchronous>, transform_indices = @transform_1, window_bounds = array<i64: 16, 128>}, {pipeline_mode = #tpu.pipeline_mode<synchronous>, transform_indices = @transform_2, window_bounds = array<i64: 32, 96>}, {pipeline_mode = #tpu.pipeline_mode<synchronous>, transform_indices = @transform_3, window_bounds = array<i64: 32, 32>}, {pipeline_mode = #tpu.pipeline_mode<synchronous>, transform_indices = @transform_4, window_bounds = array<i64: 32, 64>}, {pipeline_mode = #tpu.pipeline_mode<synchronous>, transform_indices = @transform_5, window_bounds = array<i64: 64, 32>}, {pipeline_mode = #tpu.pipeline_mode<synchronous>, transform_indices = @transform_6, window_bounds = array<i64: 32, 32>}, {pipeline_mode = #tpu.pipeline_mode<synchronous>, transform_indices = @transform_7, window_bounds = array<i64: 32, 128>}, {pipeline_mode = #tpu.pipeline_mode<synchronous>, transform_indices = @transform_8, window_bounds = array<i64: 2, 128>}]} {
    %c0 = arith.constant 0 : index
    %c0_0 = arith.constant 0 : index
    %0 = vector.load %arg3[%c0, %c0_0] : memref<16x128xf32, #tpu.memory_space<vmem>>, vector<16x128xf32>
    %1 = vector.extract_strided_slice %0 {offsets = [0, 0], sizes = [1, 32], strides = [1, 1]} : vector<16x128xf32> to vector<1x32xf32>
    %2 = vector.extract_strided_slice %0 {offsets = [1, 0], sizes = [1, 32], strides = [1, 1]} : vector<16x128xf32> to vector<1x32xf32>
    %3 = vector.extract_strided_slice %0 {offsets = [2, 0], sizes = [1, 96], strides = [1, 1]} : vector<16x128xf32> to vector<1x96xf32>
    %4 = vector.extract_strided_slice %0 {offsets = [3, 0], sizes = [1, 32], strides = [1, 1]} : vector<16x128xf32> to vector<1x32xf32>
    %5 = vector.extract_strided_slice %0 {offsets = [4, 0], sizes = [1, 32], strides = [1, 1]} : vector<16x128xf32> to vector<1x32xf32>
    %6 = vector.extract_strided_slice %0 {offsets = [5, 0], sizes = [1, 32], strides = [1, 1]} : vector<16x128xf32> to vector<1x32xf32>
    %7 = vector.extract_strided_slice %0 {offsets = [6, 0], sizes = [1, 64], strides = [1, 1]} : vector<16x128xf32> to vector<1x64xf32>
    %8 = vector.extract_strided_slice %0 {offsets = [7, 0], sizes = [1, 32], strides = [1, 1]} : vector<16x128xf32> to vector<1x32xf32>
    %9 = vector.extract_strided_slice %0 {offsets = [8, 0], sizes = [1, 32], strides = [1, 1]} : vector<16x128xf32> to vector<1x32xf32>
    %10 = vector.extract_strided_slice %0 {offsets = [9, 0], sizes = [1, 32], strides = [1, 1]} : vector<16x128xf32> to vector<1x32xf32>
    %11 = vector.extract_strided_slice %0 {offsets = [10, 0], sizes = [1, 32], strides = [1, 1]} : vector<16x128xf32> to vector<1x32xf32>
    %12 = vector.extract_strided_slice %0 {offsets = [11, 0], sizes = [1, 128], strides = [1, 1]} : vector<16x128xf32> to vector<1x128xf32>
    %c0_1 = arith.constant 0 : index
    %c0_2 = arith.constant 0 : index
    %c0_3 = arith.constant 0 : index
    %13 = vector.load %arg2[%c0_1, %c0_2, %c0_3] : memref<2x8x32xf32, #tpu.memory_space<vmem>>, vector<2x8x32xf32>
    %14 = vector.shape_cast %13 : vector<2x8x32xf32> to vector<16x32xf32>
    %15 = tpu.iota {dimensions = array<i32: 2>} : vector<1x1x8xi32>
    %c0_4 = arith.constant 0 : index
    %16 = memref.load %arg1[%c0_4] : memref<2xi32, #tpu.memory_space<smem>>
    %c0_i32 = arith.constant 0 : i32
    %17 = vector.broadcast %c0_i32 : i32 to vector<1x1x8xi32>
    %18 = vector.broadcast %16 : i32 to vector<1x1x8xi32>
    %19 = arith.addi %18, %17 : vector<1x1x8xi32>
    %c1 = arith.constant 1 : index
    %20 = memref.load %arg1[%c1] : memref<2xi32, #tpu.memory_space<smem>>
    %c0_i32_5 = arith.constant 0 : i32
    %21 = vector.broadcast %c0_i32_5 : i32 to vector<1x1x8xi32>
    %22 = vector.broadcast %20 : i32 to vector<1x1x8xi32>
    %23 = arith.addi %22, %21 : vector<1x1x8xi32>
    %24 = tpu.concatenate %19, %23 in 0 : vector<1x1x8xi32>, vector<1x1x8xi32> -> vector<2x1x8xi32>
    %25 = vector.broadcast %15 : vector<1x1x8xi32> to vector<2x1x8xi32>
    %26 = arith.cmpi slt, %25, %24 : vector<2x1x8xi32>
    %cst = arith.constant 0.000000e+00 : f32
    %cst_6 = arith.constant -1.000000e+09 : f32
    %27 = vector.broadcast %cst : f32 to vector<2x1x8xf32>
    %28 = vector.broadcast %cst_6 : f32 to vector<2x1x8xf32>
    %29 = arith.select %26, %27, %28 : vector<2x1x8xi1>, vector<2x1x8xf32>
    %cst_7 = arith.constant dense<0.000000e+00> : vector<16xf32>
    %30 = vector.multi_reduction <add>, %14, %cst_7 [1] : vector<16x32xf32> to vector<16xf32>
    %31 = vector.shape_cast %30 : vector<16xf32> to vector<16x1xf32>
    %cst_8 = arith.constant 3.200000e+01 : f32
    %32 = vector.broadcast %cst_8 : f32 to vector<16x1xf32>
    %33 = arith.divf %31, %32 : vector<16x1xf32>
    %34 = vector.broadcast %33 : vector<16x1xf32> to vector<16x32xf32>
    %35 = arith.subf %14, %34 : vector<16x32xf32>
    %36 = arith.mulf %35, %35 : vector<16x32xf32>
    %cst_9 = arith.constant dense<0.000000e+00> : vector<16xf32>
    %37 = vector.multi_reduction <add>, %36, %cst_9 [1] : vector<16x32xf32> to vector<16xf32>
    %38 = vector.shape_cast %37 : vector<16xf32> to vector<16x1xf32>
    %cst_10 = arith.constant 3.200000e+01 : f32
    %39 = vector.broadcast %cst_10 : f32 to vector<16x1xf32>
    %40 = arith.divf %38, %39 : vector<16x1xf32>
    %cst_11 = arith.constant 9.99999996E-13 : f32
    %41 = vector.broadcast %cst_11 : f32 to vector<16x1xf32>
    %42 = arith.addf %40, %41 : vector<16x1xf32>
    %43 = math.rsqrt %42 : vector<16x1xf32>
    %44 = vector.broadcast %43 : vector<16x1xf32> to vector<16x32xf32>
    %45 = arith.mulf %35, %44 : vector<16x32xf32>
    %46 = vector.broadcast %1 : vector<1x32xf32> to vector<16x32xf32>
    %47 = arith.mulf %45, %46 : vector<16x32xf32>
    %48 = vector.broadcast %2 : vector<1x32xf32> to vector<16x32xf32>
    %49 = arith.addf %47, %48 : vector<16x32xf32>
    %c0_12 = arith.constant 0 : index
    %c0_13 = arith.constant 0 : index
    %50 = vector.load %arg4[%c0_12, %c0_13] : memref<32x96xf32, #tpu.memory_space<vmem>>, vector<32x96xf32>
    %cst_14 = arith.constant dense<0.000000e+00> : vector<16x96xf32>
    %51 = tpu.matmul %49, %50, %cst_14 {dimension_numbers = #tpu.dot_dimension_numbers<[1], [0], [0], [1], [0, 0, 1, 1], [], []>} : vector<16x32xf32>, vector<32x96xf32>, vector<16x96xf32> -> vector<16x96xf32>
    %52 = vector.broadcast %3 : vector<1x96xf32> to vector<16x96xf32>
    %53 = arith.addf %51, %52 : vector<16x96xf32>
    %54 = vector.extract_strided_slice %53 {offsets = [0, 0], sizes = [16, 32], strides = [1, 1]} : vector<16x96xf32> to vector<16x32xf32>
    %55 = vector.shape_cast %54 : vector<16x32xf32> to vector<2x8x32xf32>
    %56 = vector.extract_strided_slice %53 {offsets = [0, 32], sizes = [16, 32], strides = [1, 1]} : vector<16x96xf32> to vector<16x32xf32>
    %57 = vector.shape_cast %56 : vector<16x32xf32> to vector<2x8x32xf32>
    %58 = vector.extract_strided_slice %53 {offsets = [0, 64], sizes = [16, 32], strides = [1, 1]} : vector<16x96xf32> to vector<16x32xf32>
    %59 = vector.shape_cast %58 : vector<16x32xf32> to vector<2x8x32xf32>
    %c0_15 = arith.constant 0 : index
    %c0_16 = arith.constant 0 : index
    %60 = vector.load %arg5[%c0_15, %c0_16] : memref<32x32xf32, #tpu.memory_space<vmem>>, vector<32x32xf32>
    %cst_17 = arith.constant 0.000000e+00 : f32
    %61 = vector.broadcast %cst_17 : f32 to vector<16x32xf32>
    %62 = vector.extract_strided_slice %55 {offsets = [0, 0, 0], sizes = [2, 8, 16], strides = [1, 1, 1]} : vector<2x8x32xf32> to vector<2x8x16xf32>
    %63 = vector.extract_strided_slice %57 {offsets = [0, 0, 0], sizes = [2, 8, 16], strides = [1, 1, 1]} : vector<2x8x32xf32> to vector<2x8x16xf32>
    %64 = vector.extract_strided_slice %59 {offsets = [0, 0, 0], sizes = [2, 8, 16], strides = [1, 1, 1]} : vector<2x8x32xf32> to vector<2x8x16xf32>
    "tpu.trace_start"() <{level = 10 : i32, message = "bqd,bkd->bqk"}> : () -> ()
    %cst_18 = arith.constant dense<0.000000e+00> : vector<2x8x8xf32>
    %65 = tpu.matmul %62, %63, %cst_18 {dimension_numbers = #tpu.dot_dimension_numbers<[2], [2], [1], [1], [0, 0, 0, 1, 1, 1], [0], [0]>} : vector<2x8x16xf32>, vector<2x8x16xf32>, vector<2x8x8xf32> -> vector<2x8x8xf32>
    "tpu.trace_stop"() : () -> ()
    %cst_19 = arith.constant 2.500000e-01 : f32
    %66 = vector.broadcast %cst_19 : f32 to vector<2x8x8xf32>
    %67 = arith.mulf %65, %66 : vector<2x8x8xf32>
    %68 = vector.broadcast %29 : vector<2x1x8xf32> to vector<2x8x8xf32>
    %69 = arith.addf %67, %68 : vector<2x8x8xf32>
    %cst_20 = arith.constant dense<0xFF800000> : vector<2x8xf32>
    %70 = vector.multi_reduction <maximumf>, %69, %cst_20 [2] : vector<2x8x8xf32> to vector<2x8xf32>
    %71 = vector.shape_cast %70 : vector<2x8xf32> to vector<2x8x1xf32>
    %72 = vector.broadcast %71 : vector<2x8x1xf32> to vector<2x8x8xf32>
    %73 = arith.subf %69, %72 : vector<2x8x8xf32>
    %74 = math.exp %73 : vector<2x8x8xf32>
    %cst_21 = arith.constant dense<0.000000e+00> : vector<2x8xf32>
    %75 = vector.multi_reduction <add>, %74, %cst_21 [2] : vector<2x8x8xf32> to vector<2x8xf32>
    %76 = vector.shape_cast %75 : vector<2x8xf32> to vector<2x8x1xf32>
    %77 = tpu.reciprocal %76 {approx = true} : vector<2x8x1xf32> -> vector<2x8x1xf32>
    %78 = vector.broadcast %77 : vector<2x8x1xf32> to vector<2x8x8xf32>
    %79 = arith.mulf %74, %78 : vector<2x8x8xf32>
    "tpu.trace_start"() <{level = 10 : i32, message = "bqk,bkd->bqd"}> : () -> ()
    %cst_22 = arith.constant dense<0.000000e+00> : vector<2x8x16xf32>
    %80 = tpu.matmul %79, %64, %cst_22 {dimension_numbers = #tpu.dot_dimension_numbers<[2], [1], [1], [2], [0, 0, 0, 1, 1, 2], [0], [0]>} : vector<2x8x8xf32>, vector<2x8x16xf32>, vector<2x8x16xf32> -> vector<2x8x16xf32>
    "tpu.trace_stop"() : () -> ()
    %81 = vector.shape_cast %80 : vector<2x8x16xf32> to vector<16x16xf32>
    %82 = vector.extract_strided_slice %60 {offsets = [0, 0], sizes = [16, 32], strides = [1, 1]} : vector<32x32xf32> to vector<16x32xf32>
    %cst_23 = arith.constant dense<0.000000e+00> : vector<16x32xf32>
    %83 = tpu.matmul %81, %82, %cst_23 {dimension_numbers = #tpu.dot_dimension_numbers<[1], [0], [0], [1], [0, 0, 1, 1], [], []>} : vector<16x16xf32>, vector<16x32xf32>, vector<16x32xf32> -> vector<16x32xf32>
    %84 = arith.addf %61, %83 : vector<16x32xf32>
    %85 = vector.extract_strided_slice %55 {offsets = [0, 0, 16], sizes = [2, 8, 16], strides = [1, 1, 1]} : vector<2x8x32xf32> to vector<2x8x16xf32>
    %86 = vector.extract_strided_slice %57 {offsets = [0, 0, 16], sizes = [2, 8, 16], strides = [1, 1, 1]} : vector<2x8x32xf32> to vector<2x8x16xf32>
    %87 = vector.extract_strided_slice %59 {offsets = [0, 0, 16], sizes = [2, 8, 16], strides = [1, 1, 1]} : vector<2x8x32xf32> to vector<2x8x16xf32>
    "tpu.trace_start"() <{level = 10 : i32, message = "bqd,bkd->bqk"}> : () -> ()
    %cst_24 = arith.constant dense<0.000000e+00> : vector<2x8x8xf32>
    %88 = tpu.matmul %85, %86, %cst_24 {dimension_numbers = #tpu.dot_dimension_numbers<[2], [2], [1], [1], [0, 0, 0, 1, 1, 1], [0], [0]>} : vector<2x8x16xf32>, vector<2x8x16xf32>, vector<2x8x8xf32> -> vector<2x8x8xf32>
    "tpu.trace_stop"() : () -> ()
    %cst_25 = arith.constant 2.500000e-01 : f32
    %89 = vector.broadcast %cst_25 : f32 to vector<2x8x8xf32>
    %90 = arith.mulf %88, %89 : vector<2x8x8xf32>
    %91 = vector.broadcast %29 : vector<2x1x8xf32> to vector<2x8x8xf32>
    %92 = arith.addf %90, %91 : vector<2x8x8xf32>
    %cst_26 = arith.constant dense<0xFF800000> : vector<2x8xf32>
    %93 = vector.multi_reduction <maximumf>, %92, %cst_26 [2] : vector<2x8x8xf32> to vector<2x8xf32>
    %94 = vector.shape_cast %93 : vector<2x8xf32> to vector<2x8x1xf32>
    %95 = vector.broadcast %94 : vector<2x8x1xf32> to vector<2x8x8xf32>
    %96 = arith.subf %92, %95 : vector<2x8x8xf32>
    %97 = math.exp %96 : vector<2x8x8xf32>
    %cst_27 = arith.constant dense<0.000000e+00> : vector<2x8xf32>
    %98 = vector.multi_reduction <add>, %97, %cst_27 [2] : vector<2x8x8xf32> to vector<2x8xf32>
    %99 = vector.shape_cast %98 : vector<2x8xf32> to vector<2x8x1xf32>
    %100 = tpu.reciprocal %99 {approx = true} : vector<2x8x1xf32> -> vector<2x8x1xf32>
    %101 = vector.broadcast %100 : vector<2x8x1xf32> to vector<2x8x8xf32>
    %102 = arith.mulf %97, %101 : vector<2x8x8xf32>
    "tpu.trace_start"() <{level = 10 : i32, message = "bqk,bkd->bqd"}> : () -> ()
    %cst_28 = arith.constant dense<0.000000e+00> : vector<2x8x16xf32>
    %103 = tpu.matmul %102, %87, %cst_28 {dimension_numbers = #tpu.dot_dimension_numbers<[2], [1], [1], [2], [0, 0, 0, 1, 1, 2], [0], [0]>} : vector<2x8x8xf32>, vector<2x8x16xf32>, vector<2x8x16xf32> -> vector<2x8x16xf32>
    "tpu.trace_stop"() : () -> ()
    %104 = vector.shape_cast %103 : vector<2x8x16xf32> to vector<16x16xf32>
    %105 = vector.extract_strided_slice %60 {offsets = [16, 0], sizes = [16, 32], strides = [1, 1]} : vector<32x32xf32> to vector<16x32xf32>
    %cst_29 = arith.constant dense<0.000000e+00> : vector<16x32xf32>
    %106 = tpu.matmul %104, %105, %cst_29 {dimension_numbers = #tpu.dot_dimension_numbers<[1], [0], [0], [1], [0, 0, 1, 1], [], []>} : vector<16x16xf32>, vector<16x32xf32>, vector<16x32xf32> -> vector<16x32xf32>
    %107 = arith.addf %84, %106 : vector<16x32xf32>
    %108 = vector.broadcast %4 : vector<1x32xf32> to vector<16x32xf32>
    %109 = arith.addf %107, %108 : vector<16x32xf32>
    %110 = arith.addf %49, %109 : vector<16x32xf32>
    %cst_30 = arith.constant dense<0.000000e+00> : vector<16xf32>
    %111 = vector.multi_reduction <add>, %110, %cst_30 [1] : vector<16x32xf32> to vector<16xf32>
    %112 = vector.shape_cast %111 : vector<16xf32> to vector<16x1xf32>
    %cst_31 = arith.constant 3.200000e+01 : f32
    %113 = vector.broadcast %cst_31 : f32 to vector<16x1xf32>
    %114 = arith.divf %112, %113 : vector<16x1xf32>
    %115 = vector.broadcast %114 : vector<16x1xf32> to vector<16x32xf32>
    %116 = arith.subf %110, %115 : vector<16x32xf32>
    %117 = arith.mulf %116, %116 : vector<16x32xf32>
    %cst_32 = arith.constant dense<0.000000e+00> : vector<16xf32>
    %118 = vector.multi_reduction <add>, %117, %cst_32 [1] : vector<16x32xf32> to vector<16xf32>
    %119 = vector.shape_cast %118 : vector<16xf32> to vector<16x1xf32>
    %cst_33 = arith.constant 3.200000e+01 : f32
    %120 = vector.broadcast %cst_33 : f32 to vector<16x1xf32>
    %121 = arith.divf %119, %120 : vector<16x1xf32>
    %cst_34 = arith.constant 9.99999996E-13 : f32
    %122 = vector.broadcast %cst_34 : f32 to vector<16x1xf32>
    %123 = arith.addf %121, %122 : vector<16x1xf32>
    %124 = math.rsqrt %123 : vector<16x1xf32>
    %125 = vector.broadcast %124 : vector<16x1xf32> to vector<16x32xf32>
    %126 = arith.mulf %116, %125 : vector<16x32xf32>
    %127 = vector.broadcast %5 : vector<1x32xf32> to vector<16x32xf32>
    %128 = arith.mulf %126, %127 : vector<16x32xf32>
    %129 = vector.broadcast %6 : vector<1x32xf32> to vector<16x32xf32>
    %130 = arith.addf %128, %129 : vector<16x32xf32>
    %c0_35 = arith.constant 0 : index
    %c0_36 = arith.constant 0 : index
    %131 = vector.load %arg6[%c0_35, %c0_36] : memref<32x64xf32, #tpu.memory_space<vmem>>, vector<32x64xf32>
    %cst_37 = arith.constant dense<0.000000e+00> : vector<16x64xf32>
    %132 = tpu.matmul %130, %131, %cst_37 {dimension_numbers = #tpu.dot_dimension_numbers<[1], [0], [0], [1], [0, 0, 1, 1], [], []>} : vector<16x32xf32>, vector<32x64xf32>, vector<16x64xf32> -> vector<16x64xf32>
    %133 = vector.broadcast %7 : vector<1x64xf32> to vector<16x64xf32>
    %134 = arith.addf %132, %133 : vector<16x64xf32>
    %cst_38 = arith.constant 5.000000e-01 : f32
    %135 = vector.broadcast %cst_38 : f32 to vector<16x64xf32>
    %136 = arith.mulf %135, %134 : vector<16x64xf32>
    %cst_39 = arith.constant 4.471500e-02 : f32
    %137 = vector.broadcast %cst_39 : f32 to vector<16x64xf32>
    %138 = arith.mulf %137, %134 : vector<16x64xf32>
    %139 = arith.mulf %138, %134 : vector<16x64xf32>
    %140 = arith.mulf %139, %134 : vector<16x64xf32>
    %141 = arith.addf %134, %140 : vector<16x64xf32>
    %cst_40 = arith.constant 0.797884583 : f32
    %142 = vector.broadcast %cst_40 : f32 to vector<16x64xf32>
    %143 = arith.mulf %142, %141 : vector<16x64xf32>
    %144 = math.tanh %143 : vector<16x64xf32>
    %cst_41 = arith.constant 1.000000e+00 : f32
    %145 = vector.broadcast %cst_41 : f32 to vector<16x64xf32>
    %146 = arith.addf %145, %144 : vector<16x64xf32>
    %147 = arith.mulf %136, %146 : vector<16x64xf32>
    %c0_42 = arith.constant 0 : index
    %c0_43 = arith.constant 0 : index
    %148 = vector.load %arg7[%c0_42, %c0_43] : memref<64x32xf32, #tpu.memory_space<vmem>>, vector<64x32xf32>
    %cst_44 = arith.constant dense<0.000000e+00> : vector<16x32xf32>
    %149 = tpu.matmul %147, %148, %cst_44 {dimension_numbers = #tpu.dot_dimension_numbers<[1], [0], [0], [1], [0, 0, 1, 1], [], []>} : vector<16x64xf32>, vector<64x32xf32>, vector<16x32xf32> -> vector<16x32xf32>
    %150 = vector.broadcast %8 : vector<1x32xf32> to vector<16x32xf32>
    %151 = arith.addf %149, %150 : vector<16x32xf32>
    %152 = arith.addf %130, %151 : vector<16x32xf32>
    %cst_45 = arith.constant dense<0.000000e+00> : vector<16xf32>
    %153 = vector.multi_reduction <add>, %152, %cst_45 [1] : vector<16x32xf32> to vector<16xf32>
    %154 = vector.shape_cast %153 : vector<16xf32> to vector<16x1xf32>
    %cst_46 = arith.constant 3.200000e+01 : f32
    %155 = vector.broadcast %cst_46 : f32 to vector<16x1xf32>
    %156 = arith.divf %154, %155 : vector<16x1xf32>
    %157 = vector.broadcast %156 : vector<16x1xf32> to vector<16x32xf32>
    %158 = arith.subf %152, %157 : vector<16x32xf32>
    %159 = arith.mulf %158, %158 : vector<16x32xf32>
    %cst_47 = arith.constant dense<0.000000e+00> : vector<16xf32>
    %160 = vector.multi_reduction <add>, %159, %cst_47 [1] : vector<16x32xf32> to vector<16xf32>
    %161 = vector.shape_cast %160 : vector<16xf32> to vector<16x1xf32>
    %cst_48 = arith.constant 3.200000e+01 : f32
    %162 = vector.broadcast %cst_48 : f32 to vector<16x1xf32>
    %163 = arith.divf %161, %162 : vector<16x1xf32>
    %cst_49 = arith.constant 9.99999996E-13 : f32
    %164 = vector.broadcast %cst_49 : f32 to vector<16x1xf32>
    %165 = arith.addf %163, %164 : vector<16x1xf32>
    %166 = math.rsqrt %165 : vector<16x1xf32>
    %167 = vector.broadcast %166 : vector<16x1xf32> to vector<16x32xf32>
    %168 = arith.mulf %158, %167 : vector<16x32xf32>
    %169 = vector.broadcast %9 : vector<1x32xf32> to vector<16x32xf32>
    %170 = arith.mulf %168, %169 : vector<16x32xf32>
    %171 = vector.broadcast %10 : vector<1x32xf32> to vector<16x32xf32>
    %172 = arith.addf %170, %171 : vector<16x32xf32>
    %173 = vector.extract_strided_slice %172 {offsets = [0, 0], sizes = [1, 32], strides = [1, 1]} : vector<16x32xf32> to vector<1x32xf32>
    %174 = vector.extract_strided_slice %172 {offsets = [8, 0], sizes = [1, 32], strides = [1, 1]} : vector<16x32xf32> to vector<1x32xf32>
    %175 = tpu.concatenate %173, %174 in 0 : vector<1x32xf32>, vector<1x32xf32> -> vector<2x32xf32>
    %c0_50 = arith.constant 0 : index
    %c0_51 = arith.constant 0 : index
    %176 = vector.load %arg8[%c0_50, %c0_51] : memref<32x32xf32, #tpu.memory_space<vmem>>, vector<32x32xf32>
    %cst_52 = arith.constant dense<0.000000e+00> : vector<2x32xf32>
    %177 = tpu.matmul %175, %176, %cst_52 {dimension_numbers = #tpu.dot_dimension_numbers<[1], [0], [0], [1], [0, 0, 1, 1], [], []>} : vector<2x32xf32>, vector<32x32xf32>, vector<2x32xf32> -> vector<2x32xf32>
    %178 = vector.broadcast %11 : vector<1x32xf32> to vector<2x32xf32>
    %179 = arith.addf %177, %178 : vector<2x32xf32>
    %180 = math.tanh %179 : vector<2x32xf32>
    %c0_53 = arith.constant 0 : index
    %c0_54 = arith.constant 0 : index
    %181 = vector.load %arg9[%c0_53, %c0_54] : memref<32x128xf32, #tpu.memory_space<vmem>>, vector<32x128xf32>
    %cst_55 = arith.constant dense<0.000000e+00> : vector<2x128xf32>
    %182 = tpu.matmul %180, %181, %cst_55 {dimension_numbers = #tpu.dot_dimension_numbers<[1], [0], [0], [1], [0, 0, 1, 1], [], []>} : vector<2x32xf32>, vector<32x128xf32>, vector<2x128xf32> -> vector<2x128xf32>
    %183 = vector.broadcast %12 : vector<1x128xf32> to vector<2x128xf32>
    %184 = arith.addf %182, %183 : vector<2x128xf32>
    %c0_56 = arith.constant 0 : index
    %c0_57 = arith.constant 0 : index
    %185 = vector.load %arg10[%c0_56, %c0_57] : memref<2x128xf32, #tpu.memory_space<vmem>>, vector<2x128xf32>
    tpu.vector_store %arg10[%c0_56, %c0_57], %184 {strides = array<i32>} : memref<2x128xf32, #tpu.memory_space<vmem>>, vector<2x128xf32>,
    return
  }
  func.func @transform_0(%arg0: i32, %arg1: memref<2xi32, #tpu.memory_space<smem>>) -> (i32, i32, i32) {
    %c0_i32 = arith.constant 0 : i32
    %c0_i32_0 = arith.constant 0 : i32
    %c0_i32_1 = arith.constant 0 : i32
    %c0_i32_2 = arith.constant 0 : i32
    return %c0_i32, %c0_i32_0, %c0_i32_1 : i32, i32, i32
  }
  func.func @transform_1(%arg0: i32, %arg1: memref<2xi32, #tpu.memory_space<smem>>) -> (i32, i32) {
    %c0_i32 = arith.constant 0 : i32
    %c0_i32_0 = arith.constant 0 : i32
    %c0_i32_1 = arith.constant 0 : i32
    return %c0_i32, %c0_i32_0 : i32, i32
  }
  func.func @transform_2(%arg0: i32, %arg1: memref<2xi32, #tpu.memory_space<smem>>) -> (i32, i32) {
    %c0_i32 = arith.constant 0 : i32
    %c0_i32_0 = arith.constant 0 : i32
    %c0_i32_1 = arith.constant 0 : i32
    return %c0_i32, %c0_i32_0 : i32, i32
  }
  func.func @transform_3(%arg0: i32, %arg1: memref<2xi32, #tpu.memory_space<smem>>) -> (i32, i32) {
    %c0_i32 = arith.constant 0 : i32
    %c0_i32_0 = arith.constant 0 : i32
    %c0_i32_1 = arith.constant 0 : i32
    return %c0_i32, %c0_i32_0 : i32, i32
  }
  func.func @transform_4(%arg0: i32, %arg1: memref<2xi32, #tpu.memory_space<smem>>) -> (i32, i32) {
    %c0_i32 = arith.constant 0 : i32
    %c0_i32_0 = arith.constant 0 : i32
    %c0_i32_1 = arith.constant 0 : i32
    return %c0_i32, %c0_i32_0 : i32, i32
  }
  func.func @transform_5(%arg0: i32, %arg1: memref<2xi32, #tpu.memory_space<smem>>) -> (i32, i32) {
    %c0_i32 = arith.constant 0 : i32
    %c0_i32_0 = arith.constant 0 : i32
    %c0_i32_1 = arith.constant 0 : i32
    return %c0_i32, %c0_i32_0 : i32, i32
  }
  func.func @transform_6(%arg0: i32, %arg1: memref<2xi32, #tpu.memory_space<smem>>) -> (i32, i32) {
    %c0_i32 = arith.constant 0 : i32
    %c0_i32_0 = arith.constant 0 : i32
    %c0_i32_1 = arith.constant 0 : i32
    return %c0_i32, %c0_i32_0 : i32, i32
  }
  func.func @transform_7(%arg0: i32, %arg1: memref<2xi32, #tpu.memory_space<smem>>) -> (i32, i32) {
    %c0_i32 = arith.constant 0 : i32
    %c0_i32_0 = arith.constant 0 : i32
    %c0_i32_1 = arith.constant 0 : i32
    return %c0_i32, %c0_i32_0 : i32, i32
  }
  func.func @transform_8(%arg0: i32, %arg1: memref<2xi32, #tpu.memory_space<smem>>) -> (i32, i32) {
    %c0_i32 = arith.constant 0 : i32
    %c0_i32_0 = arith.constant 0 : i32
    %c0_i32_1 = arith.constant 0 : i32
    return %c0_i32, %c0_i32_0 : i32, i32
  }
}

</mosaic_0001>

<llo_original>
// kernel: tpu_custom_call.1
$region0: #{tpu_custom_call.1}
  #allocation0 [shape = 'u32[]', space=smem, size = 0x4, offset = 0x4, fixed_abs, tag = 'smem constant byte address 0x4 - core index']
  #allocation1 [shape = 'u32[144,128]{1,0:T(1,128)}', space=vmem, size = 0x12000, scoped, tag = 'internal scratch']
  #allocation2 [shape = 's32[1]{0}', space=sflag, size = 0x4, scoped, tag = 'scoped memory for tpu_custom_call.1']
  #allocation3 [shape = 'u8[512]{0}', space=smem, size = 0x200, scoped, tag = 'prefetched SMEM operand 0']
  %s0 = inlined_call_operand.hbm [shape: s32[2], index: 0, kind: input, shape index: {}]
  %s1 = inlined_call_operand.hbm [shape: f32[2,8,32], index: 1, kind: input, shape index: {}]
  %s2 = inlined_call_operand.hbm [shape: f32[16,128], index: 2, kind: input, shape index: {}]
  %s3 = inlined_call_operand.vmem [shape: f32[32,96], index: 3, kind: input, shape index: {}]
  %s4 = inlined_call_operand.vmem [shape: f32[32,32], index: 4, kind: input, shape index: {}]
  %s5 = inlined_call_operand.vmem [shape: f32[32,64], index: 5, kind: input, shape index: {}]
  %s6 = inlined_call_operand.vmem [shape: f32[64,32], index: 6, kind: input, shape index: {}]
  %s7 = inlined_call_operand.hbm [shape: f32[32,32], index: 7, kind: input, shape index: {}]
  %s8 = inlined_call_operand.hbm [shape: f32[32,128], index: 8, kind: input, shape index: {}]
  %s9 = inlined_call_operand.hbm [shape: f32[2,128], index: 9, kind: output, shape index: {}]
  %s10 = sld [smem:[#allocation0]]
  $region58: #{tpu_custom_call.1} parent=0
    _
  %s12 = ssub.s32 1, %s10
  %s13 = scalar_select 0, %s12, %s10
  %15 = dma.hbm_to_smem %s0, 16, [#allocation3], [#allocation2]
  %16 = dma.done [#allocation2], 16
  %17 = sfence
  $region1: #{tpu_custom_call.1} parent=0
    #allocation4 [shape = 'u8[8192]{0}', space=vmem, size = 0x2000, scoped, tag = 'input window, operand 1, single buffered']
    #allocation5 [shape = 's32[1]{0}', space=sflag, size = 0x4, scoped, tag = 'scoped memory for tpu_custom_call.1']
    #allocation6 [shape = 's32[1]{0}', space=sflag, size = 0x4, scoped, tag = 'scoped memory for tpu_custom_call.1']
    #allocation7 [shape = 'u8[8192]{0}', space=vmem, size = 0x2000, scoped, tag = 'input window, operand 2, single buffered']
    #allocation8 [shape = 's32[1]{0}', space=sflag, size = 0x4, scoped, tag = 'scoped memory for tpu_custom_call.1']
    #allocation9 [shape = 'u8[16384]{0}', space=vmem, size = 0x4000, scoped, tag = 'input window, operand 7, single buffered']
    #allocation10 [shape = 'u8[16384]{0}', space=vmem, size = 0x4000, scoped, tag = 'input window, operand 8, single buffered']
    #allocation11 [shape = 's32[1]{0}', space=sflag, size = 0x4, scoped, tag = 'scoped memory for tpu_custom_call.1']
    #allocation12 [shape = 'u8[1024]{0}', space=vmem, size = 0x400, scoped, tag = 'output window, operand 0, single buffered']
    %18 = vsyncpa [#allocation5], 0
    %19 = vsyncpa [#allocation8], 0
    %20 = vsyncpa [#allocation11], 0
    %21 = vsyncpa [#allocation6], 0
    // Predicated region
    $region2: #{tpu_custom_call.1} parent=1 // pred_check
      _
    $region3: #{tpu_custom_call.1} parent=1 // pred_check_branch
      %23 = sbr.rel (0) target = $region5
    $region4: #{tpu_custom_call.1} parent=1 // pred_region
      %s25 = ssub.s32 256, 256
      %26 = vsyncadd [#allocation5], %s25
      %s27 = sshll.u32 [#allocation4], 4
      %s28 = int_to_ptr.vmem [resolvable:$true] %s27
      %33 = dma.hbm_to_vmem [thread:$0]  %s1, 256, %s28, [#allocation5], 128, 128, 8
    $region5: #{tpu_custom_call.1} parent=1 // pred_fallthru
      _
    // Predicated region
    $region6: #{tpu_custom_call.1} parent=1 // pred_check
      _
    $region7: #{tpu_custom_call.1} parent=1 // pred_check_branch
      %35 = sbr.rel (0) target = $region9
    $region8: #{tpu_custom_call.1} parent=1 // pred_region
      %s37 = ssub.s32 256, 256
      %38 = vsyncadd [#allocation8], %s37
      %s39 = sshll.u32 [#allocation7], 4
      %s40 = int_to_ptr.vmem [resolvable:$true] %s39
      %45 = dma.hbm_to_vmem [thread:$0]  %s2, 256, %s40, [#allocation8], 128, 128, 8
    $region9: #{tpu_custom_call.1} parent=1 // pred_fallthru
      _
    // Predicated region
    $region10: #{tpu_custom_call.1} parent=1 // pred_check
      _
    $region11: #{tpu_custom_call.1} parent=1 // pred_check_branch
      %47 = sbr.rel (0) target = $region13
    $region12: #{tpu_custom_call.1} parent=1 // pred_region
      _
    $region13: #{tpu_custom_call.1} parent=1 // pred_fallthru
      _
    // Predicated region
    $region14: #{tpu_custom_call.1} parent=1 // pred_check
      _
    $region15: #{tpu_custom_call.1} parent=1 // pred_check_branch
      %49 = sbr.rel (0) target = $region17
    $region16: #{tpu_custom_call.1} parent=1 // pred_region
      _
    $region17: #{tpu_custom_call.1} parent=1 // pred_fallthru
      _
    // Predicated region
    $region18: #{tpu_custom_call.1} parent=1 // pred_check
      _
    $region19: #{tpu_custom_call.1} parent=1 // pred_check_branch
      %51 = sbr.rel (0) target = $region21
    $region20: #{tpu_custom_call.1} parent=1 // pred_region
      _
    $region21: #{tpu_custom_call.1} parent=1 // pred_fallthru
      _
    // Predicated region
    $region22: #{tpu_custom_call.1} parent=1 // pred_check
      _
    $region23: #{tpu_custom_call.1} parent=1 // pred_check_branch
      %53 = sbr.rel (0) target = $region25
    $region24: #{tpu_custom_call.1} parent=1 // pred_region
      _
    $region25: #{tpu_custom_call.1} parent=1 // pred_fallthru
      _
    // Predicated region
    $region26: #{tpu_custom_call.1} parent=1 // pred_check
      _
    $region27: #{tpu_custom_call.1} parent=1 // pred_check_branch
      %55 = sbr.rel (0) target = $region29
    $region28: #{tpu_custom_call.1} parent=1 // pred_region
      %s57 = ssub.s32 512, 512
      %58 = vsyncadd [#allocation8], %s57
      %s59 = sshll.u32 [#allocation9], 4
      %s60 = int_to_ptr.vmem [resolvable:$true] %s59
      %65 = dma.hbm_to_vmem [thread:$0]  %s7, 512, %s60, [#allocation8], 128, 128, 8
    $region29: #{tpu_custom_call.1} parent=1 // pred_fallthru
      _
    // Predicated region
    $region30: #{tpu_custom_call.1} parent=1 // pred_check
      _
    $region31: #{tpu_custom_call.1} parent=1 // pred_check_branch
      %67 = sbr.rel (0) target = $region33
    $region32: #{tpu_custom_call.1} parent=1 // pred_region
      %s69 = ssub.s32 512, 512
      %70 = vsyncadd [#allocation11], %s69
      %s71 = sshll.u32 [#allocation10], 4
      %s72 = int_to_ptr.vmem [resolvable:$true] %s71
      %77 = dma.hbm_to_vmem [thread:$0]  %s8, 512, %s72, [#allocation11], 128, 128, 8
    $region33: #{tpu_custom_call.1} parent=1 // pred_fallthru
      _
    // Predicated region
    $region34: #{tpu_custom_call.1} parent=1 // pred_check
      _
    $region35: #{tpu_custom_call.1} parent=1 // pred_check_branch
      %79 = sbr.rel (0) target = $region37
    $region36: #{tpu_custom_call.1} parent=1 // pred_region
      %80 = dma.done [#allocation5], 256
    $region37: #{tpu_custom_call.1} parent=1 // pred_fallthru
      _
    // Predicated region
    $region38: #{tpu_custom_call.1} parent=1 // pred_check
      _
    $region39: #{tpu_custom_call.1} parent=1 // pred_check_branch
      %82 = sbr.rel (0) target = $region41
    $region40: #{tpu_custom_call.1} parent=1 // pred_region
      %83 = dma.done [#allocation8], 256
    $region41: #{tpu_custom_call.1} parent=1 // pred_fallthru
      _
    // Predicated region
    $region42: #{tpu_custom_call.1} parent=1 // pred_check
      _
    $region43: #{tpu_custom_call.1} parent=1 // pred_check_branch
      %85 = sbr.rel (0) target = $region45
    $region44: #{tpu_custom_call.1} parent=1 // pred_region
      %86 = dma.done [#allocation8], 512
    $region45: #{tpu_custom_call.1} parent=1 // pred_fallthru
      _
    // Predicated region
    $region46: #{tpu_custom_call.1} parent=1 // pred_check
      _
    $region47: #{tpu_custom_call.1} parent=1 // pred_check_branch
      %88 = sbr.rel (0) target = $region49
    $region48: #{tpu_custom_call.1} parent=1 // pred_region
      %89 = dma.done [#allocation11], 512
    $region49: #{tpu_custom_call.1} parent=1 // pred_fallthru
      _
    %v90 = vld [vmem:[#allocation7] sm:$0xff]
    %v91 = vld [vmem:[#allocation7 + $0x8] sm:$0xff]
    %v92 = vld [vmem:[#allocation4] sm:$0xff]
    %v93 = vld [vmem:[#allocation4 + $0x8] sm:$0xff]
    %v94 = vlaneseq
    %v95 = vand.u32 %v94, 127
    %s96 = sld [smem:[#allocation3]]
    %v97 = vstv %s96
    %s98 = sld [smem:[#allocation3 + $0x1]]
    %v99 = vstv %s98
    %vm100 = vcmp.lt.s32.totalorder %v95, %v97
    %vm101 = vcmp.lt.s32.totalorder %v95, %v99
    %v102 = vsel %vm100, 0.0, -1e+09
    %v103 = vsel %vm101, 0.0, -1e+09
    %vm104 = vcmask 261120
    %v105 = vsel %vm104, %v92, 0.0
    %106 = vadd.xlane.f32.xlu0 %v105
    %v107 = vpop.xlane.xlu0 %106
    %v108 = vsel %vm104, %v93, 0.0
    %109 = vadd.xlane.f32.xlu0 %v108
    %v110 = vpop.xlane.xlu0 %109
    %v111 = vrcp.pop 32.0
    %v112 = vmul.f32 %v107, %v111
    %v113 = vmul.f32 %v110, %v111
    %v114 = vsub.f32 %v92, %v112
    %v115 = vsub.f32 %v93, %v113
    %v116 = vmul.f32 %v114, %v114
    %v117 = vmul.f32 %v115, %v115
    %v118 = vsel %vm104, %v116, 0.0
    %119 = vadd.xlane.f32.xlu0 %v118
    %v120 = vpop.xlane.xlu0 %119
    %v121 = vsel %vm104, %v117, 0.0
    %122 = vadd.xlane.f32.xlu0 %v121
    %v123 = vpop.xlane.xlu0 %122
    %v124 = vmul.f32 %v120, %v111
    %v125 = vmul.f32 %v123, %v111
    %v126 = vadd.f32 %v124, 1e-12
    %v127 = vadd.f32 %v125, 1e-12
    %v128 = vrsqrt.pop %v126
    %v129 = vrsqrt.pop %v127
    %v130 = vmul.f32 %v114, %v128
    %v131 = vmul.f32 %v115, %v129
    %v132 = vlaneseq
    %v133 = vshrl.u32 %v132, 7
    %v134 = vsub.s32 0, %v133
    %v135 = vrot.slane %v90, %v134
    %v136 = vmul.f32 %v130, %v135
    %v137 = vmul.f32 %v131, %v135
    %v138 = vlaneseq
    %v139 = vshrl.u32 %v138, 7
    %v140 = vsub.s32 1, %v139
    %v141 = vrot.slane %v90, %v140
    %v142 = vadd.f32 %v136, %v141
    %v143 = vadd.f32 %v137, %v141
    %v144 = vld [vmem:[%s3] sm:$0xff]
    %v145 = vld [vmem:[%s3 + $0x8] sm:$0xff]
    %v146 = vld [vmem:[%s3 + $0x10] sm:$0xff]
    %v147 = vld [vmem:[%s3 + $0x18] sm:$0xff]
    %v148 = vlaneseq
    %v149 = vshrl.u32 %v148, 7
    %v150 = vsub.s32 2, %v149
    %v151 = vrot.slane %v90, %v150
    %v153 = vsel %vm104, %v142, 0
    %v156 = vsel %vm104, %v143, 0
    %158 = vmatprep.subr.mxu0 0.0
    %159 = vmatpush1.msra.mxu0 0.0
    %160 = vmatprep.subr.mxu0 0.0
    %161 = vmatpush1.msra.mxu0 0.0
    %162 = vmatprep.subr.mxu0 0.0
    %163 = vmatpush1.msra.mxu0 0.0
    %164 = vmatprep.subr.mxu0 0.0
    %165 = vmatpush1.msra.mxu0 0.0
    %166 = vmatprep.subr.mxu0 0.0
    %167 = vmatpush1.msra.mxu0 0.0
    %168 = vmatprep.subr.mxu0 0.0
    %169 = vmatpush1.msra.mxu0 0.0
    %170 = vmatprep.subr.mxu0 0.0
    %171 = vmatpush1.msra.mxu0 0.0
    %172 = vmatprep.subr.mxu0 0.0
    %173 = vmatpush1.msra.mxu0 0.0
    %174 = vmatprep.subr.mxu0 0.0
    %175 = vmatpush1.msra.mxu0 0.0
    %176 = vmatprep.subr.mxu0 0.0
    %177 = vmatpush1.msra.mxu0 0.0
    %178 = vmatprep.subr.mxu0 0.0
    %179 = vmatpush1.msra.mxu0 0.0
    %180 = vmatprep.subr.mxu0 0.0
    %181 = vmatpush1.msra.mxu0 0.0
    %182 = vmatprep.subr.mxu0 0.0
    %183 = vmatpush1.msra.mxu0 %v147
    %184 = vmatprep.subr.mxu0 0.0
    %185 = vmatpush1.msra.mxu0 %v146
    %186 = vmatprep.subr.mxu0 0.0
    %187 = vmatpush1.msra.mxu0 %v145
    %188 = vmatprep.subr.mxu0 0.0
    %189 = vmatpush1.msra.mxu0 %v144
    %190 = vmatprep.subr.mxu0 0.0
    %191 = vmatpush2.msra.mxu0 0.0
    %192 = vmatprep.subr.mxu0 0.0
    %193 = vmatpush2.msra.mxu0 0.0
    %194 = vmatprep.subr.mxu0 0.0
    %195 = vmatpush2.msra.mxu0 0.0
    %196 = vmatprep.subr.mxu0 0.0
    %197 = vmatpush2.msra.mxu0 0.0
    %198 = vmatprep.subr.mxu0 0.0
    %199 = vmatpush2.msra.mxu0 0.0
    %200 = vmatprep.subr.mxu0 0.0
    %201 = vmatpush2.msra.mxu0 0.0
    %202 = vmatprep.subr.mxu0 0.0
    %203 = vmatpush2.msra.mxu0 0.0
    %204 = vmatprep.subr.mxu0 0.0
    %205 = vmatpush2.msra.mxu0 0.0
    %206 = vmatprep.subr.mxu0 0.0
    %207 = vmatpush2.msra.mxu0 0.0
    %208 = vmatprep.subr.mxu0 0.0
    %209 = vmatpush2.msra.mxu0 0.0
    %210 = vmatprep.subr.mxu0 0.0
    %211 = vmatpush2.msra.mxu0 0.0
    %212 = vmatprep.subr.mxu0 0.0
    %213 = vmatpush2.msra.mxu0 0.0
    %214 = vmatprep.subr.mxu0 0.0
    %215 = vmatpush2.msra.mxu0 0.0
    %216 = vmatprep.subr.mxu0 0.0
    %217 = vmatpush2.msra.mxu0 0.0
    %218 = vmatprep.subr.mxu0 0.0
    %219 = vmatpush2.msra.mxu0 0.0
    %220 = vmatprep.subr.mxu0 0.0
    %221 = vmatpush2.msra.mxu0 0.0
    %222 = vmatprep.mubr.f32.mxu0 0.0
    %223 = vmatmul.mubr.f32.gmra.mxu0 %v153
    %v224 = vpop.f32.mrf.mxu0
    %v225 = vadd.f32 %v151, %v224
    %v226 = vpop.f32.mrf.mxu0
    %227 = vmatprep.mubr.f32.mxu0 0.0
    %228 = vmatmul.mubr.f32.gmra.mxu0 %v156
    %v229 = vpop.f32.mrf.mxu0
    %v230 = vadd.f32 %v151, %v229
    %v231 = vpop.f32.mrf.mxu0
    %232 = vdwg.mxu0
    %v233 = vld [vmem:[%s4] sm:$0xff]
    %v234 = vld [vmem:[%s4 + $0x8] sm:$0xff]
    %v235 = vld [vmem:[%s4 + $0x10] sm:$0xff]
    %v236 = vld [vmem:[%s4 + $0x18] sm:$0xff]
    %238 = vrot.lane.b32.xlu0 %v225, 96
    %v239 = vpop.permute.xlu0 %238
    %vm240 = vcmask 130048
    %v241 = vsel %vm240, %v225, 0
    %v243 = vsel %vm240, %v239, 0
    %245 = vmatprep.subr.mxu0 0.0
    %246 = vmatpush1.xpose.msra.mxu0 0.0
    %247 = vmatprep.subr.mxu0 0.0
    %248 = vmatpush1.xpose.msra.mxu0 0.0
    %249 = vmatprep.subr.mxu0 0.0
    %250 = vmatpush1.xpose.msra.mxu0 0.0
    %251 = vmatprep.subr.mxu0 0.0
    %252 = vmatpush1.xpose.msra.mxu0 0.0
    %253 = vmatprep.subr.mxu0 0.0
    %254 = vmatpush1.xpose.msra.mxu0 0.0
    %255 = vmatprep.subr.mxu0 0.0
    %256 = vmatpush1.xpose.msra.mxu0 0.0
    %257 = vmatprep.subr.mxu0 0.0
    %258 = vmatpush1.xpose.msra.mxu0 0.0
    %259 = vmatprep.subr.mxu0 0.0
    %260 = vmatpush1.xpose.msra.mxu0 0.0
    %261 = vmatprep.subr.mxu0 0.0
    %262 = vmatpush1.xpose.msra.mxu0 0.0
    %263 = vmatprep.subr.mxu0 0.0
    %264 = vmatpush1.xpose.msra.mxu0 0.0
    %265 = vmatprep.subr.mxu0 0.0
    %266 = vmatpush1.xpose.msra.mxu0 0.0
    %267 = vmatprep.subr.mxu0 0.0
    %268 = vmatpush1.xpose.msra.mxu0 0.0
    %269 = vmatprep.subr.mxu0 0.0
    %270 = vmatpush1.xpose.msra.mxu0 0.0
    %271 = vmatprep.subr.mxu0 0.0
    %272 = vmatpush1.xpose.msra.mxu0 0.0
    %273 = vmatprep.subr.mxu0 0.0
    %274 = vmatpush1.xpose.msra.mxu0 0.0
    %275 = vmatprep.subr.mxu0 0.0
    %276 = vmatpush1.xpose.msra.mxu0 %v243
    %277 = vmatprep.subr.mxu0 0.0
    %278 = vmatpush2.xpose.msra.mxu0 0.0
    %279 = vmatprep.subr.mxu0 0.0
    %280 = vmatpush2.xpose.msra.mxu0 0.0
    %281 = vmatprep.subr.mxu0 0.0
    %282 = vmatpush2.xpose.msra.mxu0 0.0
    %283 = vmatprep.subr.mxu0 0.0
    %284 = vmatpush2.xpose.msra.mxu0 0.0
    %285 = vmatprep.subr.mxu0 0.0
    %286 = vmatpush2.xpose.msra.mxu0 0.0
    %287 = vmatprep.subr.mxu0 0.0
    %288 = vmatpush2.xpose.msra.mxu0 0.0
    %289 = vmatprep.subr.mxu0 0.0
    %290 = vmatpush2.xpose.msra.mxu0 0.0
    %291 = vmatprep.subr.mxu0 0.0
    %292 = vmatpush2.xpose.msra.mxu0 0.0
    %293 = vmatprep.subr.mxu0 0.0
    %294 = vmatpush2.xpose.msra.mxu0 0.0
    %295 = vmatprep.subr.mxu0 0.0
    %296 = vmatpush2.xpose.msra.mxu0 0.0
    %297 = vmatprep.subr.mxu0 0.0
    %298 = vmatpush2.xpose.msra.mxu0 0.0
    %299 = vmatprep.subr.mxu0 0.0
    %300 = vmatpush2.xpose.msra.mxu0 0.0
    %301 = vmatprep.subr.mxu0 0.0
    %302 = vmatpush2.xpose.msra.mxu0 0.0
    %303 = vmatprep.subr.mxu0 0.0
    %304 = vmatpush2.xpose.msra.mxu0 0.0
    %305 = vmatprep.subr.mxu0 0.0
    %306 = vmatpush2.xpose.msra.mxu0 0.0
    %307 = vmatprep.subr.mxu0 0.0
    %308 = vmatpush2.xpose.msra.mxu0 0.0
    %309 = vmatprep.mubr.f32.mxu0 0.0
    %310 = vmatmul.mubr.f32.gmra.mxu0 %v241
    %v311 = vpop.f32.mrf.mxu0
    %v312 = vadd.f32 0.0, %v311
    %v313 = vpop.f32.mrf.mxu0
    %314 = vdwg.mxu0
    %316 = vrot.lane.b32.xlu0 %v230, 96
    %v317 = vpop.permute.xlu0 %316
    %v318 = vsel %vm240, %v230, 0
    %v320 = vsel %vm240, %v317, 0
    %322 = vmatprep.subr.mxu0 0.0
    %323 = vmatpush1.xpose.msra.mxu0 0.0
    %324 = vmatprep.subr.mxu0 0.0
    %325 = vmatpush1.xpose.msra.mxu0 0.0
    %326 = vmatprep.subr.mxu0 0.0
    %327 = vmatpush1.xpose.msra.mxu0 0.0
    %328 = vmatprep.subr.mxu0 0.0
    %329 = vmatpush1.xpose.msra.mxu0 0.0
    %330 = vmatprep.subr.mxu0 0.0
    %331 = vmatpush1.xpose.msra.mxu0 0.0
    %332 = vmatprep.subr.mxu0 0.0
    %333 = vmatpush1.xpose.msra.mxu0 0.0
    %334 = vmatprep.subr.mxu0 0.0
    %335 = vmatpush1.xpose.msra.mxu0 0.0
    %336 = vmatprep.subr.mxu0 0.0
    %337 = vmatpush1.xpose.msra.mxu0 0.0
    %338 = vmatprep.subr.mxu0 0.0
    %339 = vmatpush1.xpose.msra.mxu0 0.0
    %340 = vmatprep.subr.mxu0 0.0
    %341 = vmatpush1.xpose.msra.mxu0 0.0
    %342 = vmatprep.subr.mxu0 0.0
    %343 = vmatpush1.xpose.msra.mxu0 0.0
    %344 = vmatprep.subr.mxu0 0.0
    %345 = vmatpush1.xpose.msra.mxu0 0.0
    %346 = vmatprep.subr.mxu0 0.0
    %347 = vmatpush1.xpose.msra.mxu0 0.0
    %348 = vmatprep.subr.mxu0 0.0
    %349 = vmatpush1.xpose.msra.mxu0 0.0
    %350 = vmatprep.subr.mxu0 0.0
    %351 = vmatpush1.xpose.msra.mxu0 0.0
    %352 = vmatprep.subr.mxu0 0.0
    %353 = vmatpush1.xpose.msra.mxu0 %v320
    %354 = vmatprep.subr.mxu0 0.0
    %355 = vmatpush2.xpose.msra.mxu0 0.0
    %356 = vmatprep.subr.mxu0 0.0
    %357 = vmatpush2.xpose.msra.mxu0 0.0
    %358 = vmatprep.subr.mxu0 0.0
    %359 = vmatpush2.xpose.msra.mxu0 0.0
    %360 = vmatprep.subr.mxu0 0.0
    %361 = vmatpush2.xpose.msra.mxu0 0.0
    %362 = vmatprep.subr.mxu0 0.0
    %363 = vmatpush2.xpose.msra.mxu0 0.0
    %364 = vmatprep.subr.mxu0 0.0
    %365 = vmatpush2.xpose.msra.mxu0 0.0
    %366 = vmatprep.subr.mxu0 0.0
    %367 = vmatpush2.xpose.msra.mxu0 0.0
    %368 = vmatprep.subr.mxu0 0.0
    %369 = vmatpush2.xpose.msra.mxu0 0.0
    %370 = vmatprep.subr.mxu0 0.0
    %371 = vmatpush2.xpose.msra.mxu0 0.0
    %372 = vmatprep.subr.mxu0 0.0
    %373 = vmatpush2.xpose.msra.mxu0 0.0
    %374 = vmatprep.subr.mxu0 0.0
    %375 = vmatpush2.xpose.msra.mxu0 0.0
    %376 = vmatprep.subr.mxu0 0.0
    %377 = vmatpush2.xpose.msra.mxu0 0.0
    %378 = vmatprep.subr.mxu0 0.0
    %379 = vmatpush2.xpose.msra.mxu0 0.0
    %380 = vmatprep.subr.mxu0 0.0
    %381 = vmatpush2.xpose.msra.mxu0 0.0
    %382 = vmatprep.subr.mxu0 0.0
    %383 = vmatpush2.xpose.msra.mxu0 0.0
    %384 = vmatprep.subr.mxu0 0.0
    %385 = vmatpush2.xpose.msra.mxu0 0.0
    %386 = vmatprep.mubr.f32.mxu0 0.0
    %387 = vmatmul.mubr.f32.gmra.mxu0 %v318
    %v388 = vpop.f32.mrf.mxu0
    %v389 = vadd.f32 0.0, %v388
    %v390 = vpop.f32.mrf.mxu0
    %391 = vdwg.mxu0
    %v392 = vmul.f32 %v312, 0.25
    %v393 = vmul.f32 %v389, 0.25
    %v394 = vlaneseq
    %v395 = vshrl.u32 %v394, 7
    %v396 = vsub.s32 0, %v395
    %v397 = vrot.slane %v102, %v396
    %v398 = vlaneseq
    %v399 = vshrl.u32 %v398, 7
    %v400 = vsub.s32 0, %v399
    %v401 = vrot.slane %v103, %v400
    %v402 = vadd.f32 %v392, %v397
    %v403 = vadd.f32 %v393, %v401
    %vm404 = vcmask 64512
    %v405 = vsel %vm404, %v402, -inf
    %406 = vmax.xlane.f32.xlu0 %v405
    %v407 = vpop.xlane.xlu0 %406
    %v408 = vsel %vm404, %v403, -inf
    %409 = vmax.xlane.f32.xlu0 %v408
    %v410 = vpop.xlane.xlu0 %409
    %v411 = vsub.f32 %v402, %v407
    %v412 = vsub.f32 %v403, %v410
    %v413 = vmul.f32 %v411, 1.442695
    %v414 = vpow.pop %v413
    %v415 = vmul.f32 %v412, 1.442695
    %v416 = vpow.pop %v415
    %v417 = vsel %vm404, %v414, 0.0
    %418 = vadd.xlane.f32.xlu0 %v417
    %v419 = vpop.xlane.xlu0 %418
    %v420 = vsel %vm404, %v416, 0.0
    %421 = vadd.xlane.f32.xlu0 %v420
    %v422 = vpop.xlane.xlu0 %421
    %v423 = vrcp.pop %v419
    %v424 = vrcp.pop %v422
    %v425 = vmul.f32 %v414, %v423
    %v426 = vmul.f32 %v416, %v424
    %427 = vrot.lane.b32.xlu0 %v225, 64
    %v428 = vpop.permute.xlu0 %427
    %v431 = vsel %vm404, %v425, 0
    %433 = vmatprep.subr.mxu0 0.0
    %434 = vmatpush1.msra.mxu0 0.0
    %435 = vmatprep.subr.mxu0 0.0
    %436 = vmatpush1.msra.mxu0 0.0
    %437 = vmatprep.subr.mxu0 0.0
    %438 = vmatpush1.msra.mxu0 0.0
    %439 = vmatprep.subr.mxu0 0.0
    %440 = vmatpush1.msra.mxu0 0.0
    %441 = vmatprep.subr.mxu0 0.0
    %442 = vmatpush1.msra.mxu0 0.0
    %443 = vmatprep.subr.mxu0 0.0
    %444 = vmatpush1.msra.mxu0 0.0
    %445 = vmatprep.subr.mxu0 0.0
    %446 = vmatpush1.msra.mxu0 0.0
    %447 = vmatprep.subr.mxu0 0.0
    %448 = vmatpush1.msra.mxu0 0.0
    %449 = vmatprep.subr.mxu0 0.0
    %450 = vmatpush1.msra.mxu0 0.0
    %451 = vmatprep.subr.mxu0 0.0
    %452 = vmatpush1.msra.mxu0 0.0
    %453 = vmatprep.subr.mxu0 0.0
    %454 = vmatpush1.msra.mxu0 0.0
    %455 = vmatprep.subr.mxu0 0.0
    %456 = vmatpush1.msra.mxu0 0.0
    %457 = vmatprep.subr.mxu0 0.0
    %458 = vmatpush1.msra.mxu0 0.0
    %459 = vmatprep.subr.mxu0 0.0
    %460 = vmatpush1.msra.mxu0 0.0
    %461 = vmatprep.subr.mxu0 0.0
    %462 = vmatpush1.msra.mxu0 0.0
    %463 = vmatprep.subr.mxu0 0.0
    %464 = vmatpush1.msra.mxu0 %v428
    %465 = vmatprep.subr.mxu0 0.0
    %466 = vmatpush2.msra.mxu0 0.0
    %467 = vmatprep.subr.mxu0 0.0
    %468 = vmatpush2.msra.mxu0 0.0
    %469 = vmatprep.subr.mxu0 0.0
    %470 = vmatpush2.msra.mxu0 0.0
    %471 = vmatprep.subr.mxu0 0.0
    %472 = vmatpush2.msra.mxu0 0.0
    %473 = vmatprep.subr.mxu0 0.0
    %474 = vmatpush2.msra.mxu0 0.0
    %475 = vmatprep.subr.mxu0 0.0
    %476 = vmatpush2.msra.mxu0 0.0
    %477 = vmatprep.subr.mxu0 0.0
    %478 = vmatpush2.msra.mxu0 0.0
    %479 = vmatprep.subr.mxu0 0.0
    %480 = vmatpush2.msra.mxu0 0.0
    %481 = vmatprep.subr.mxu0 0.0
    %482 = vmatpush2.msra.mxu0 0.0
    %483 = vmatprep.subr.mxu0 0.0
    %484 = vmatpush2.msra.mxu0 0.0
    %485 = vmatprep.subr.mxu0 0.0
    %486 = vmatpush2.msra.mxu0 0.0
    %487 = vmatprep.subr.mxu0 0.0
    %488 = vmatpush2.msra.mxu0 0.0
    %489 = vmatprep.subr.mxu0 0.0
    %490 = vmatpush2.msra.mxu0 0.0
    %491 = vmatprep.subr.mxu0 0.0
    %492 = vmatpush2.msra.mxu0 0.0
    %493 = vmatprep.subr.mxu0 0.0
    %494 = vmatpush2.msra.mxu0 0.0
    %495 = vmatprep.subr.mxu0 0.0
    %496 = vmatpush2.msra.mxu0 0.0
    %497 = vmatprep.mubr.f32.mxu0 0.0
    %498 = vmatmul.mubr.f32.gmra.mxu0 %v431
    %v499 = vpop.f32.mrf.mxu0
    %v500 = vadd.f32 0.0, %v499
    %v501 = vpop.f32.mrf.mxu0
    %502 = vdwg.mxu0
    %503 = vrot.lane.b32.xlu0 %v230, 64
    %v504 = vpop.permute.xlu0 %503
    %v507 = vsel %vm404, %v426, 0
    %509 = vmatprep.subr.mxu0 0.0
    %510 = vmatpush1.msra.mxu0 0.0
    %511 = vmatprep.subr.mxu0 0.0
    %512 = vmatpush1.msra.mxu0 0.0
    %513 = vmatprep.subr.mxu0 0.0
    %514 = vmatpush1.msra.mxu0 0.0
    %515 = vmatprep.subr.mxu0 0.0
    %516 = vmatpush1.msra.mxu0 0.0
    %517 = vmatprep.subr.mxu0 0.0
    %518 = vmatpush1.msra.mxu0 0.0
    %519 = vmatprep.subr.mxu0 0.0
    %520 = vmatpush1.msra.mxu0 0.0
    %521 = vmatprep.subr.mxu0 0.0
    %522 = vmatpush1.msra.mxu0 0.0
    %523 = vmatprep.subr.mxu0 0.0
    %524 = vmatpush1.msra.mxu0 0.0
    %525 = vmatprep.subr.mxu0 0.0
    %526 = vmatpush1.msra.mxu0 0.0
    %527 = vmatprep.subr.mxu0 0.0
    %528 = vmatpush1.msra.mxu0 0.0
    %529 = vmatprep.subr.mxu0 0.0
    %530 = vmatpush1.msra.mxu0 0.0
    %531 = vmatprep.subr.mxu0 0.0
    %532 = vmatpush1.msra.mxu0 0.0
    %533 = vmatprep.subr.mxu0 0.0
    %534 = vmatpush1.msra.mxu0 0.0
    %535 = vmatprep.subr.mxu0 0.0
    %536 = vmatpush1.msra.mxu0 0.0
    %537 = vmatprep.subr.mxu0 0.0
    %538 = vmatpush1.msra.mxu0 0.0
    %539 = vmatprep.subr.mxu0 0.0
    %540 = vmatpush1.msra.mxu0 %v504
    %541 = vmatprep.subr.mxu0 0.0
    %542 = vmatpush2.msra.mxu0 0.0
    %543 = vmatprep.subr.mxu0 0.0
    %544 = vmatpush2.msra.mxu0 0.0
    %545 = vmatprep.subr.mxu0 0.0
    %546 = vmatpush2.msra.mxu0 0.0
    %547 = vmatprep.subr.mxu0 0.0
    %548 = vmatpush2.msra.mxu0 0.0
    %549 = vmatprep.subr.mxu0 0.0
    %550 = vmatpush2.msra.mxu0 0.0
    %551 = vmatprep.subr.mxu0 0.0
    %552 = vmatpush2.msra.mxu0 0.0
    %553 = vmatprep.subr.mxu0 0.0
    %554 = vmatpush2.msra.mxu0 0.0
    %555 = vmatprep.subr.mxu0 0.0
    %556 = vmatpush2.msra.mxu0 0.0
    %557 = vmatprep.subr.mxu0 0.0
    %558 = vmatpush2.msra.mxu0 0.0
    %559 = vmatprep.subr.mxu0 0.0
    %560 = vmatpush2.msra.mxu0 0.0
    %561 = vmatprep.subr.mxu0 0.0
    %562 = vmatpush2.msra.mxu0 0.0
    %563 = vmatprep.subr.mxu0 0.0
    %564 = vmatpush2.msra.mxu0 0.0
    %565 = vmatprep.subr.mxu0 0.0
    %566 = vmatpush2.msra.mxu0 0.0
    %567 = vmatprep.subr.mxu0 0.0
    %568 = vmatpush2.msra.mxu0 0.0
    %569 = vmatprep.subr.mxu0 0.0
    %570 = vmatpush2.msra.mxu0 0.0
    %571 = vmatprep.subr.mxu0 0.0
    %572 = vmatpush2.msra.mxu0 0.0
    %573 = vmatprep.mubr.f32.mxu0 0.0
    %574 = vmatmul.mubr.f32.gmra.mxu0 %v507
    %v575 = vpop.f32.mrf.mxu0
    %v576 = vadd.f32 0.0, %v575
    %v577 = vpop.f32.mrf.mxu0
    %578 = vdwg.mxu0
    %579 = vrot.lane.b32.xlu0 %v225, 112
    %v580 = vpop.permute.xlu0 %579
    %581 = vrot.lane.b32.xlu0 %v225, 80
    %v582 = vpop.permute.xlu0 %581
    %v583 = vsel %vm240, %v580, 0
    %v585 = vsel %vm240, %v582, 0
    %587 = vmatprep.subr.mxu0 0.0
    %588 = vmatpush1.xpose.msra.mxu0 0.0
    %589 = vmatprep.subr.mxu0 0.0
    %590 = vmatpush1.xpose.msra.mxu0 0.0
    %591 = vmatprep.subr.mxu0 0.0
    %592 = vmatpush1.xpose.msra.mxu0 0.0
    %593 = vmatprep.subr.mxu0 0.0
    %594 = vmatpush1.xpose.msra.mxu0 0.0
    %595 = vmatprep.subr.mxu0 0.0
    %596 = vmatpush1.xpose.msra.mxu0 0.0
    %597 = vmatprep.subr.mxu0 0.0
    %598 = vmatpush1.xpose.msra.mxu0 0.0
    %599 = vmatprep.subr.mxu0 0.0
    %600 = vmatpush1.xpose.msra.mxu0 0.0
    %601 = vmatprep.subr.mxu0 0.0
    %602 = vmatpush1.xpose.msra.mxu0 0.0
    %603 = vmatprep.subr.mxu0 0.0
    %604 = vmatpush1.xpose.msra.mxu0 0.0
    %605 = vmatprep.subr.mxu0 0.0
    %606 = vmatpush1.xpose.msra.mxu0 0.0
    %607 = vmatprep.subr.mxu0 0.0
    %608 = vmatpush1.xpose.msra.mxu0 0.0
    %609 = vmatprep.subr.mxu0 0.0
    %610 = vmatpush1.xpose.msra.mxu0 0.0
    %611 = vmatprep.subr.mxu0 0.0
    %612 = vmatpush1.xpose.msra.mxu0 0.0
    %613 = vmatprep.subr.mxu0 0.0
    %614 = vmatpush1.xpose.msra.mxu0 0.0
    %615 = vmatprep.subr.mxu0 0.0
    %616 = vmatpush1.xpose.msra.mxu0 0.0
    %617 = vmatprep.subr.mxu0 0.0
    %618 = vmatpush1.xpose.msra.mxu0 %v585
    %619 = vmatprep.subr.mxu0 0.0
    %620 = vmatpush2.xpose.msra.mxu0 0.0
    %621 = vmatprep.subr.mxu0 0.0
    %622 = vmatpush2.xpose.msra.mxu0 0.0
    %623 = vmatprep.subr.mxu0 0.0
    %624 = vmatpush2.xpose.msra.mxu0 0.0
    %625 = vmatprep.subr.mxu0 0.0
    %626 = vmatpush2.xpose.msra.mxu0 0.0
    %627 = vmatprep.subr.mxu0 0.0
    %628 = vmatpush2.xpose.msra.mxu0 0.0
    %629 = vmatprep.subr.mxu0 0.0
    %630 = vmatpush2.xpose.msra.mxu0 0.0
    %631 = vmatprep.subr.mxu0 0.0
    %632 = vmatpush2.xpose.msra.mxu0 0.0
    %633 = vmatprep.subr.mxu0 0.0
    %634 = vmatpush2.xpose.msra.mxu0 0.0
    %635 = vmatprep.subr.mxu0 0.0
    %636 = vmatpush2.xpose.msra.mxu0 0.0
    %637 = vmatprep.subr.mxu0 0.0
    %638 = vmatpush2.xpose.msra.mxu0 0.0
    %639 = vmatprep.subr.mxu0 0.0
    %640 = vmatpush2.xpose.msra.mxu0 0.0
    %641 = vmatprep.subr.mxu0 0.0
    %642 = vmatpush2.xpose.msra.mxu0 0.0
    %643 = vmatprep.subr.mxu0 0.0
    %644 = vmatpush2.xpose.msra.mxu0 0.0
    %645 = vmatprep.subr.mxu0 0.0
    %646 = vmatpush2.xpose.msra.mxu0 0.0
    %647 = vmatprep.subr.mxu0 0.0
    %648 = vmatpush2.xpose.msra.mxu0 0.0
    %649 = vmatprep.subr.mxu0 0.0
    %650 = vmatpush2.xpose.msra.mxu0 0.0
    %651 = vmatprep.mubr.f32.mxu0 0.0
    %652 = vmatmul.mubr.f32.gmra.mxu0 %v583
    %v653 = vpop.f32.mrf.mxu0
    %v654 = vadd.f32 0.0, %v653
    %v655 = vpop.f32.mrf.mxu0
    %656 = vdwg.mxu0
    %657 = vrot.lane.b32.xlu0 %v230, 112
    %v658 = vpop.permute.xlu0 %657
    %659 = vrot.lane.b32.xlu0 %v230, 80
    %v660 = vpop.permute.xlu0 %659
    %v661 = vsel %vm240, %v658, 0
    %v663 = vsel %vm240, %v660, 0
    %665 = vmatprep.subr.mxu0 0.0
    %666 = vmatpush1.xpose.msra.mxu0 0.0
    %667 = vmatprep.subr.mxu0 0.0
    %668 = vmatpush1.xpose.msra.mxu0 0.0
    %669 = vmatprep.subr.mxu0 0.0
    %670 = vmatpush1.xpose.msra.mxu0 0.0
    %671 = vmatprep.subr.mxu0 0.0
    %672 = vmatpush1.xpose.msra.mxu0 0.0
    %673 = vmatprep.subr.mxu0 0.0
    %674 = vmatpush1.xpose.msra.mxu0 0.0
    %675 = vmatprep.subr.mxu0 0.0
    %676 = vmatpush1.xpose.msra.mxu0 0.0
    %677 = vmatprep.subr.mxu0 0.0
    %678 = vmatpush1.xpose.msra.mxu0 0.0
    %679 = vmatprep.subr.mxu0 0.0
    %680 = vmatpush1.xpose.msra.mxu0 0.0
    %681 = vmatprep.subr.mxu0 0.0
    %682 = vmatpush1.xpose.msra.mxu0 0.0
    %683 = vmatprep.subr.mxu0 0.0
    %684 = vmatpush1.xpose.msra.mxu0 0.0
    %685 = vmatprep.subr.mxu0 0.0
    %686 = vmatpush1.xpose.msra.mxu0 0.0
    %687 = vmatprep.subr.mxu0 0.0
    %688 = vmatpush1.xpose.msra.mxu0 0.0
    %689 = vmatprep.subr.mxu0 0.0
    %690 = vmatpush1.xpose.msra.mxu0 0.0
    %691 = vmatprep.subr.mxu0 0.0
    %692 = vmatpush1.xpose.msra.mxu0 0.0
    %693 = vmatprep.subr.mxu0 0.0
    %694 = vmatpush1.xpose.msra.mxu0 0.0
    %695 = vmatprep.subr.mxu0 0.0
    %696 = vmatpush1.xpose.msra.mxu0 %v663
    %697 = vmatprep.subr.mxu0 0.0
    %698 = vmatpush2.xpose.msra.mxu0 0.0
    %699 = vmatprep.subr.mxu0 0.0
    %700 = vmatpush2.xpose.msra.mxu0 0.0
    %701 = vmatprep.subr.mxu0 0.0
    %702 = vmatpush2.xpose.msra.mxu0 0.0
    %703 = vmatprep.subr.mxu0 0.0
    %704 = vmatpush2.xpose.msra.mxu0 0.0
    %705 = vmatprep.subr.mxu0 0.0
    %706 = vmatpush2.xpose.msra.mxu0 0.0
    %707 = vmatprep.subr.mxu0 0.0
    %708 = vmatpush2.xpose.msra.mxu0 0.0
    %709 = vmatprep.subr.mxu0 0.0
    %710 = vmatpush2.xpose.msra.mxu0 0.0
    %711 = vmatprep.subr.mxu0 0.0
    %712 = vmatpush2.xpose.msra.mxu0 0.0
    %713 = vmatprep.subr.mxu0 0.0
    %714 = vmatpush2.xpose.msra.mxu0 0.0
    %715 = vmatprep.subr.mxu0 0.0
    %716 = vmatpush2.xpose.msra.mxu0 0.0
    %717 = vmatprep.subr.mxu0 0.0
    %718 = vmatpush2.xpose.msra.mxu0 0.0
    %719 = vmatprep.subr.mxu0 0.0
    %720 = vmatpush2.xpose.msra.mxu0 0.0
    %721 = vmatprep.subr.mxu0 0.0
    %722 = vmatpush2.xpose.msra.mxu0 0.0
    %723 = vmatprep.subr.mxu0 0.0
    %724 = vmatpush2.xpose.msra.mxu0 0.0
    %725 = vmatprep.subr.mxu0 0.0
    %726 = vmatpush2.xpose.msra.mxu0 0.0
    %727 = vmatprep.subr.mxu0 0.0
    %728 = vmatpush2.xpose.msra.mxu0 0.0
    %729 = vmatprep.mubr.f32.mxu0 0.0
    %730 = vmatmul.mubr.f32.gmra.mxu0 %v661
    %v731 = vpop.f32.mrf.mxu0
    %v732 = vadd.f32 0.0, %v731
    %v733 = vpop.f32.mrf.mxu0
    %734 = vdwg.mxu0
    %v735 = vmul.f32 %v654, 0.25
    %v736 = vmul.f32 %v732, 0.25
    %v737 = vadd.f32 %v735, %v397
    %v738 = vadd.f32 %v736, %v401
    %v739 = vsel %vm404, %v737, -inf
    %740 = vmax.xlane.f32.xlu0 %v739
    %v741 = vpop.xlane.xlu0 %740
    %v742 = vsel %vm404, %v738, -inf
    %743 = vmax.xlane.f32.xlu0 %v742
    %v744 = vpop.xlane.xlu0 %743
    %v745 = vsub.f32 %v737, %v741
    %v746 = vsub.f32 %v738, %v744
    %v747 = vmul.f32 %v745, 1.442695
    %v748 = vpow.pop %v747
    %v749 = vmul.f32 %v746, 1.442695
    %v750 = vpow.pop %v749
    %v751 = vsel %vm404, %v748, 0.0
    %752 = vadd.xlane.f32.xlu0 %v751
    %v753 = vpop.xlane.xlu0 %752
    %v754 = vsel %vm404, %v750, 0.0
    %755 = vadd.xlane.f32.xlu0 %v754
    %v756 = vpop.xlane.xlu0 %755
    %v757 = vrcp.pop %v753
    %v758 = vrcp.pop %v756
    %v759 = vmul.f32 %v748, %v757
    %v760 = vmul.f32 %v750, %v758
    %761 = vrot.lane.b32.xlu0 %v225, 48
    %v762 = vpop.permute.xlu0 %761
    %v765 = vsel %vm404, %v759, 0
    %767 = vmatprep.subr.mxu0 0.0
    %768 = vmatpush1.msra.mxu0 0.0
    %769 = vmatprep.subr.mxu0 0.0
    %770 = vmatpush1.msra.mxu0 0.0
    %771 = vmatprep.subr.mxu0 0.0
    %772 = vmatpush1.msra.mxu0 0.0
    %773 = vmatprep.subr.mxu0 0.0
    %774 = vmatpush1.msra.mxu0 0.0
    %775 = vmatprep.subr.mxu0 0.0
    %776 = vmatpush1.msra.mxu0 0.0
    %777 = vmatprep.subr.mxu0 0.0
    %778 = vmatpush1.msra.mxu0 0.0
    %779 = vmatprep.subr.mxu0 0.0
    %780 = vmatpush1.msra.mxu0 0.0
    %781 = vmatprep.subr.mxu0 0.0
    %782 = vmatpush1.msra.mxu0 0.0
    %783 = vmatprep.subr.mxu0 0.0
    %784 = vmatpush1.msra.mxu0 0.0
    %785 = vmatprep.subr.mxu0 0.0
    %786 = vmatpush1.msra.mxu0 0.0
    %787 = vmatprep.subr.mxu0 0.0
    %788 = vmatpush1.msra.mxu0 0.0
    %789 = vmatprep.subr.mxu0 0.0
    %790 = vmatpush1.msra.mxu0 0.0
    %791 = vmatprep.subr.mxu0 0.0
    %792 = vmatpush1.msra.mxu0 0.0
    %793 = vmatprep.subr.mxu0 0.0
    %794 = vmatpush1.msra.mxu0 0.0
    %795 = vmatprep.subr.mxu0 0.0
    %796 = vmatpush1.msra.mxu0 0.0
    %797 = vmatprep.subr.mxu0 0.0
    %798 = vmatpush1.msra.mxu0 %v762
    %799 = vmatprep.subr.mxu0 0.0
    %800 = vmatpush2.msra.mxu0 0.0
    %801 = vmatprep.subr.mxu0 0.0
    %802 = vmatpush2.msra.mxu0 0.0
    %803 = vmatprep.subr.mxu0 0.0
    %804 = vmatpush2.msra.mxu0 0.0
    %805 = vmatprep.subr.mxu0 0.0
    %806 = vmatpush2.msra.mxu0 0.0
    %807 = vmatprep.subr.mxu0 0.0
    %808 = vmatpush2.msra.mxu0 0.0
    %809 = vmatprep.subr.mxu0 0.0
    %810 = vmatpush2.msra.mxu0 0.0
    %811 = vmatprep.subr.mxu0 0.0
    %812 = vmatpush2.msra.mxu0 0.0
    %813 = vmatprep.subr.mxu0 0.0
    %814 = vmatpush2.msra.mxu0 0.0
    %815 = vmatprep.subr.mxu0 0.0
    %816 = vmatpush2.msra.mxu0 0.0
    %817 = vmatprep.subr.mxu0 0.0
    %818 = vmatpush2.msra.mxu0 0.0
    %819 = vmatprep.subr.mxu0 0.0
    %820 = vmatpush2.msra.mxu0 0.0
    %821 = vmatprep.subr.mxu0 0.0
    %822 = vmatpush2.msra.mxu0 0.0
    %823 = vmatprep.subr.mxu0 0.0
    %824 = vmatpush2.msra.mxu0 0.0
    %825 = vmatprep.subr.mxu0 0.0
    %826 = vmatpush2.msra.mxu0 0.0
    %827 = vmatprep.subr.mxu0 0.0
    %828 = vmatpush2.msra.mxu0 0.0
    %829 = vmatprep.subr.mxu0 0.0
    %830 = vmatpush2.msra.mxu0 0.0
    %831 = vmatprep.mubr.f32.mxu0 0.0
    %832 = vmatmul.mubr.f32.gmra.mxu0 %v765
    %v833 = vpop.f32.mrf.mxu0
    %v834 = vadd.f32 0.0, %v833
    %v835 = vpop.f32.mrf.mxu0
    %836 = vdwg.mxu0
    %837 = vrot.lane.b32.xlu0 %v230, 48
    %v838 = vpop.permute.xlu0 %837
    %v841 = vsel %vm404, %v760, 0
    %843 = vmatprep.subr.mxu0 0.0
    %844 = vmatpush1.msra.mxu0 0.0
    %845 = vmatprep.subr.mxu0 0.0
    %846 = vmatpush1.msra.mxu0 0.0
    %847 = vmatprep.subr.mxu0 0.0
    %848 = vmatpush1.msra.mxu0 0.0
    %849 = vmatprep.subr.mxu0 0.0
    %850 = vmatpush1.msra.mxu0 0.0
    %851 = vmatprep.subr.mxu0 0.0
    %852 = vmatpush1.msra.mxu0 0.0
    %853 = vmatprep.subr.mxu0 0.0
    %854 = vmatpush1.msra.mxu0 0.0
    %855 = vmatprep.subr.mxu0 0.0
    %856 = vmatpush1.msra.mxu0 0.0
    %857 = vmatprep.subr.mxu0 0.0
    %858 = vmatpush1.msra.mxu0 0.0
    %859 = vmatprep.subr.mxu0 0.0
    %860 = vmatpush1.msra.mxu0 0.0
    %861 = vmatprep.subr.mxu0 0.0
    %862 = vmatpush1.msra.mxu0 0.0
    %863 = vmatprep.subr.mxu0 0.0
    %864 = vmatpush1.msra.mxu0 0.0
    %865 = vmatprep.subr.mxu0 0.0
    %866 = vmatpush1.msra.mxu0 0.0
    %867 = vmatprep.subr.mxu0 0.0
    %868 = vmatpush1.msra.mxu0 0.0
    %869 = vmatprep.subr.mxu0 0.0
    %870 = vmatpush1.msra.mxu0 0.0
    %871 = vmatprep.subr.mxu0 0.0
    %872 = vmatpush1.msra.mxu0 0.0
    %873 = vmatprep.subr.mxu0 0.0
    %874 = vmatpush1.msra.mxu0 %v838
    %875 = vmatprep.subr.mxu0 0.0
    %876 = vmatpush2.msra.mxu0 0.0
    %877 = vmatprep.subr.mxu0 0.0
    %878 = vmatpush2.msra.mxu0 0.0
    %879 = vmatprep.subr.mxu0 0.0
    %880 = vmatpush2.msra.mxu0 0.0
    %881 = vmatprep.subr.mxu0 0.0
    %882 = vmatpush2.msra.mxu0 0.0
    %883 = vmatprep.subr.mxu0 0.0
    %884 = vmatpush2.msra.mxu0 0.0
    %885 = vmatprep.subr.mxu0 0.0
    %886 = vmatpush2.msra.mxu0 0.0
    %887 = vmatprep.subr.mxu0 0.0
    %888 = vmatpush2.msra.mxu0 0.0
    %889 = vmatprep.subr.mxu0 0.0
    %890 = vmatpush2.msra.mxu0 0.0
    %891 = vmatprep.subr.mxu0 0.0
    %892 = vmatpush2.msra.mxu0 0.0
    %893 = vmatprep.subr.mxu0 0.0
    %894 = vmatpush2.msra.mxu0 0.0
    %895 = vmatprep.subr.mxu0 0.0
    %896 = vmatpush2.msra.mxu0 0.0
    %897 = vmatprep.subr.mxu0 0.0
    %898 = vmatpush2.msra.mxu0 0.0
    %899 = vmatprep.subr.mxu0 0.0
    %900 = vmatpush2.msra.mxu0 0.0
    %901 = vmatprep.subr.mxu0 0.0
    %902 = vmatpush2.msra.mxu0 0.0
    %903 = vmatprep.subr.mxu0 0.0
    %904 = vmatpush2.msra.mxu0 0.0
    %905 = vmatprep.subr.mxu0 0.0
    %906 = vmatpush2.msra.mxu0 0.0
    %907 = vmatprep.mubr.f32.mxu0 0.0
    %908 = vmatmul.mubr.f32.gmra.mxu0 %v841
    %v909 = vpop.f32.mrf.mxu0
    %v910 = vadd.f32 0.0, %v909
    %v911 = vpop.f32.mrf.mxu0
    %912 = vdwg.mxu0
    %v914 = vsel %vm240, %v834, 0
    %v917 = vsel %vm240, %v910, 0
    %919 = vmatprep.subr.mxu0 0.0
    %920 = vmatpush1.msra.mxu0 0.0
    %921 = vmatprep.subr.mxu0 0.0
    %922 = vmatpush1.msra.mxu0 0.0
    %923 = vmatprep.subr.mxu0 0.0
    %924 = vmatpush1.msra.mxu0 0.0
    %925 = vmatprep.subr.mxu0 0.0
    %926 = vmatpush1.msra.mxu0 0.0
    %927 = vmatprep.subr.mxu0 0.0
    %928 = vmatpush1.msra.mxu0 0.0
    %929 = vmatprep.subr.mxu0 0.0
    %930 = vmatpush1.msra.mxu0 0.0
    %931 = vmatprep.subr.mxu0 0.0
    %932 = vmatpush1.msra.mxu0 0.0
    %933 = vmatprep.subr.mxu0 0.0
    %934 = vmatpush1.msra.mxu0 0.0
    %935 = vmatprep.subr.mxu0 0.0
    %936 = vmatpush1.msra.mxu0 0.0
    %937 = vmatprep.subr.mxu0 0.0
    %938 = vmatpush1.msra.mxu0 0.0
    %939 = vmatprep.subr.mxu0 0.0
    %940 = vmatpush1.msra.mxu0 0.0
    %941 = vmatprep.subr.mxu0 0.0
    %942 = vmatpush1.msra.mxu0 0.0
    %943 = vmatprep.subr.mxu0 0.0
    %944 = vmatpush1.msra.mxu0 0.0
    %945 = vmatprep.subr.mxu0 0.0
    %946 = vmatpush1.msra.mxu0 0.0
    %947 = vmatprep.subr.mxu0 0.0
    %948 = vmatpush1.msra.mxu0 %v236
    %949 = vmatprep.subr.mxu0 0.0
    %950 = vmatpush1.msra.mxu0 %v235
    %951 = vmatprep.subr.mxu0 0.0
    %952 = vmatpush2.msra.mxu0 0.0
    %953 = vmatprep.subr.mxu0 0.0
    %954 = vmatpush2.msra.mxu0 0.0
    %955 = vmatprep.subr.mxu0 0.0
    %956 = vmatpush2.msra.mxu0 0.0
    %957 = vmatprep.subr.mxu0 0.0
    %958 = vmatpush2.msra.mxu0 0.0
    %959 = vmatprep.subr.mxu0 0.0
    %960 = vmatpush2.msra.mxu0 0.0
    %961 = vmatprep.subr.mxu0 0.0
    %962 = vmatpush2.msra.mxu0 0.0
    %963 = vmatprep.subr.mxu0 0.0
    %964 = vmatpush2.msra.mxu0 0.0
    %965 = vmatprep.subr.mxu0 0.0
    %966 = vmatpush2.msra.mxu0 0.0
    %967 = vmatprep.subr.mxu0 0.0
    %968 = vmatpush2.msra.mxu0 0.0
    %969 = vmatprep.subr.mxu0 0.0
    %970 = vmatpush2.msra.mxu0 0.0
    %971 = vmatprep.subr.mxu0 0.0
    %972 = vmatpush2.msra.mxu0 0.0
    %973 = vmatprep.subr.mxu0 0.0
    %974 = vmatpush2.msra.mxu0 0.0
    %975 = vmatprep.subr.mxu0 0.0
    %976 = vmatpush2.msra.mxu0 0.0
    %977 = vmatprep.subr.mxu0 0.0
    %978 = vmatpush2.msra.mxu0 0.0
    %979 = vmatprep.subr.mxu0 0.0
    %980 = vmatpush2.msra.mxu0 0.0
    %981 = vmatprep.subr.mxu0 0.0
    %982 = vmatpush2.msra.mxu0 0.0
    %983 = vmatprep.mubr.f32.mxu0 0.0
    %984 = vmatmul.mubr.f32.gmra.mxu0 %v914
    %v985 = vpop.f32.mrf.mxu0
    %v986 = vadd.f32 0.0, %v985
    %v987 = vpop.f32.mrf.mxu0
    %988 = vmatprep.mubr.f32.mxu0 0.0
    %989 = vmatmul.mubr.f32.gmra.mxu0 %v917
    %v990 = vpop.f32.mrf.mxu0
    %v991 = vadd.f32 0.0, %v990
    %v992 = vpop.f32.mrf.mxu0
    %993 = vdwg.mxu0
    %v995 = vsel %vm240, %v500, 0
    %v998 = vsel %vm240, %v576, 0
    %1000 = vmatprep.subr.mxu0 0.0
    %1001 = vmatpush1.msra.mxu0 0.0
    %1002 = vmatprep.subr.mxu0 0.0
    %1003 = vmatpush1.msra.mxu0 0.0
    %1004 = vmatprep.subr.mxu0 0.0
    %1005 = vmatpush1.msra.mxu0 0.0
    %1006 = vmatprep.subr.mxu0 0.0
    %1007 = vmatpush1.msra.mxu0 0.0
    %1008 = vmatprep.subr.mxu0 0.0
    %1009 = vmatpush1.msra.mxu0 0.0
    %1010 = vmatprep.subr.mxu0 0.0
    %1011 = vmatpush1.msra.mxu0 0.0
    %1012 = vmatprep.subr.mxu0 0.0
    %1013 = vmatpush1.msra.mxu0 0.0
    %1014 = vmatprep.subr.mxu0 0.0
    %1015 = vmatpush1.msra.mxu0 0.0
    %1016 = vmatprep.subr.mxu0 0.0
    %1017 = vmatpush1.msra.mxu0 0.0
    %1018 = vmatprep.subr.mxu0 0.0
    %1019 = vmatpush1.msra.mxu0 0.0
    %1020 = vmatprep.subr.mxu0 0.0
    %1021 = vmatpush1.msra.mxu0 0.0
    %1022 = vmatprep.subr.mxu0 0.0
    %1023 = vmatpush1.msra.mxu0 0.0
    %1024 = vmatprep.subr.mxu0 0.0
    %1025 = vmatpush1.msra.mxu0 0.0
    %1026 = vmatprep.subr.mxu0 0.0
    %1027 = vmatpush1.msra.mxu0 0.0
    %1028 = vmatprep.subr.mxu0 0.0
    %1029 = vmatpush1.msra.mxu0 %v234
    %1030 = vmatprep.subr.mxu0 0.0
    %1031 = vmatpush1.msra.mxu0 %v233
    %1032 = vmatprep.subr.mxu0 0.0
    %1033 = vmatpush2.msra.mxu0 0.0
    %1034 = vmatprep.subr.mxu0 0.0
    %1035 = vmatpush2.msra.mxu0 0.0
    %1036 = vmatprep.subr.mxu0 0.0
    %1037 = vmatpush2.msra.mxu0 0.0
    %1038 = vmatprep.subr.mxu0 0.0
    %1039 = vmatpush2.msra.mxu0 0.0
    %1040 = vmatprep.subr.mxu0 0.0
    %1041 = vmatpush2.msra.mxu0 0.0
    %1042 = vmatprep.subr.mxu0 0.0
    %1043 = vmatpush2.msra.mxu0 0.0
    %1044 = vmatprep.subr.mxu0 0.0
    %1045 = vmatpush2.msra.mxu0 0.0
    %1046 = vmatprep.subr.mxu0 0.0
    %1047 = vmatpush2.msra.mxu0 0.0
    %1048 = vmatprep.subr.mxu0 0.0
    %1049 = vmatpush2.msra.mxu0 0.0
    %1050 = vmatprep.subr.mxu0 0.0
    %1051 = vmatpush2.msra.mxu0 0.0
    %1052 = vmatprep.subr.mxu0 0.0
    %1053 = vmatpush2.msra.mxu0 0.0
    %1054 = vmatprep.subr.mxu0 0.0
    %1055 = vmatpush2.msra.mxu0 0.0
    %1056 = vmatprep.subr.mxu0 0.0
    %1057 = vmatpush2.msra.mxu0 0.0
    %1058 = vmatprep.subr.mxu0 0.0
    %1059 = vmatpush2.msra.mxu0 0.0
    %1060 = vmatprep.subr.mxu0 0.0
    %1061 = vmatpush2.msra.mxu0 0.0
    %1062 = vmatprep.subr.mxu0 0.0
    %1063 = vmatpush2.msra.mxu0 0.0
    %1064 = vmatprep.mubr.f32.mxu0 0.0
    %1065 = vmatmul.mubr.f32.gmra.mxu0 %v995
    %v1066 = vpop.f32.mrf.mxu0
    %v1067 = vadd.f32 %v986, %v1066
    %v1068 = vpop.f32.mrf.mxu0
    %1069 = vmatprep.mubr.f32.mxu0 0.0
    %1070 = vmatmul.mubr.f32.gmra.mxu0 %v998
    %v1071 = vpop.f32.mrf.mxu0
    %v1072 = vadd.f32 %v991, %v1071
    %v1073 = vpop.f32.mrf.mxu0
    %1074 = vdwg.mxu0
    %v1075 = vlaneseq
    %v1076 = vshrl.u32 %v1075, 7
    %v1077 = vsub.s32 3, %v1076
    %v1078 = vrot.slane %v90, %v1077
    %v1079 = vadd.f32 %v1067, %v1078
    %v1080 = vadd.f32 %v1072, %v1078
    %v1081 = vadd.f32 %v142, %v1079
    %v1082 = vadd.f32 %v143, %v1080
    %v1083 = vsel %vm104, %v1081, 0.0
    %1084 = vadd.xlane.f32.xlu0 %v1083
    %v1085 = vpop.xlane.xlu0 %1084
    %v1086 = vsel %vm104, %v1082, 0.0
    %1087 = vadd.xlane.f32.xlu0 %v1086
    %v1088 = vpop.xlane.xlu0 %1087
    %v1089 = vmul.f32 %v1085, %v111
    %v1090 = vmul.f32 %v1088, %v111
    %v1091 = vsub.f32 %v1081, %v1089
    %v1092 = vsub.f32 %v1082, %v1090
    %v1093 = vmul.f32 %v1091, %v1091
    %v1094 = vmul.f32 %v1092, %v1092
    %v1095 = vsel %vm104, %v1093, 0.0
    %1096 = vadd.xlane.f32.xlu0 %v1095
    %v1097 = vpop.xlane.xlu0 %1096
    %v1098 = vsel %vm104, %v1094, 0.0
    %1099 = vadd.xlane.f32.xlu0 %v1098
    %v1100 = vpop.xlane.xlu0 %1099
    %v1101 = vmul.f32 %v1097, %v111
    %v1102 = vmul.f32 %v1100, %v111
    %v1103 = vadd.f32 %v1101, 1e-12
    %v1104 = vadd.f32 %v1102, 1e-12
    %v1105 = vrsqrt.pop %v1103
    %v1106 = vrsqrt.pop %v1104
    %v1107 = vmul.f32 %v1091, %v1105
    %v1108 = vmul.f32 %v1092, %v1106
    %v1109 = vlaneseq
    %v1110 = vshrl.u32 %v1109, 7
    %v1111 = vsub.s32 4, %v1110
    %v1112 = vrot.slane %v90, %v1111
    %v1113 = vmul.f32 %v1107, %v1112
    %v1114 = vmul.f32 %v1108, %v1112
    %v1115 = vlaneseq
    %v1116 = vshrl.u32 %v1115, 7
    %v1117 = vsub.s32 5, %v1116
    %v1118 = vrot.slane %v90, %v1117
    %v1119 = vadd.f32 %v1113, %v1118
    %v1120 = vadd.f32 %v1114, %v1118
    %v1121 = vld [vmem:[%s5] sm:$0xff]
    %v1122 = vld [vmem:[%s5 + $0x8] sm:$0xff]
    %v1123 = vld [vmem:[%s5 + $0x10] sm:$0xff]
    %v1124 = vld [vmem:[%s5 + $0x18] sm:$0xff]
    %v1125 = vlaneseq
    %v1126 = vshrl.u32 %v1125, 7
    %v1127 = vsub.s32 6, %v1126
    %v1128 = vrot.slane %v90, %v1127
    %v1130 = vsel %vm104, %v1119, 0
    %v1133 = vsel %vm104, %v1120, 0
    %1135 = vmatprep.subr.mxu0 0.0
    %1136 = vmatpush1.msra.mxu0 0.0
    %1137 = vmatprep.subr.mxu0 0.0
    %1138 = vmatpush1.msra.mxu0 0.0
    %1139 = vmatprep.subr.mxu0 0.0
    %1140 = vmatpush1.msra.mxu0 0.0
    %1141 = vmatprep.subr.mxu0 0.0
    %1142 = vmatpush1.msra.mxu0 0.0
    %1143 = vmatprep.subr.mxu0 0.0
    %1144 = vmatpush1.msra.mxu0 0.0
    %1145 = vmatprep.subr.mxu0 0.0
    %1146 = vmatpush1.msra.mxu0 0.0
    %1147 = vmatprep.subr.mxu0 0.0
    %1148 = vmatpush1.msra.mxu0 0.0
    %1149 = vmatprep.subr.mxu0 0.0
    %1150 = vmatpush1.msra.mxu0 0.0
    %1151 = vmatprep.subr.mxu0 0.0
    %1152 = vmatpush1.msra.mxu0 0.0
    %1153 = vmatprep.subr.mxu0 0.0
    %1154 = vmatpush1.msra.mxu0 0.0
    %1155 = vmatprep.subr.mxu0 0.0
    %1156 = vmatpush1.msra.mxu0 0.0
    %1157 = vmatprep.subr.mxu0 0.0
    %1158 = vmatpush1.msra.mxu0 0.0
    %1159 = vmatprep.subr.mxu0 0.0
    %1160 = vmatpush1.msra.mxu0 %v1124
    %1161 = vmatprep.subr.mxu0 0.0
    %1162 = vmatpush1.msra.mxu0 %v1123
    %1163 = vmatprep.subr.mxu0 0.0
    %1164 = vmatpush1.msra.mxu0 %v1122
    %1165 = vmatprep.subr.mxu0 0.0
    %1166 = vmatpush1.msra.mxu0 %v1121
    %1167 = vmatprep.subr.mxu0 0.0
    %1168 = vmatpush2.msra.mxu0 0.0
    %1169 = vmatprep.subr.mxu0 0.0
    %1170 = vmatpush2.msra.mxu0 0.0
    %1171 = vmatprep.subr.mxu0 0.0
    %1172 = vmatpush2.msra.mxu0 0.0
    %1173 = vmatprep.subr.mxu0 0.0
    %1174 = vmatpush2.msra.mxu0 0.0
    %1175 = vmatprep.subr.mxu0 0.0
    %1176 = vmatpush2.msra.mxu0 0.0
    %1177 = vmatprep.subr.mxu0 0.0
    %1178 = vmatpush2.msra.mxu0 0.0
    %1179 = vmatprep.subr.mxu0 0.0
    %1180 = vmatpush2.msra.mxu0 0.0
    %1181 = vmatprep.subr.mxu0 0.0
    %1182 = vmatpush2.msra.mxu0 0.0
    %1183 = vmatprep.subr.mxu0 0.0
    %1184 = vmatpush2.msra.mxu0 0.0
    %1185 = vmatprep.subr.mxu0 0.0
    %1186 = vmatpush2.msra.mxu0 0.0
    %1187 = vmatprep.subr.mxu0 0.0
    %1188 = vmatpush2.msra.mxu0 0.0
    %1189 = vmatprep.subr.mxu0 0.0
    %1190 = vmatpush2.msra.mxu0 0.0
    %1191 = vmatprep.subr.mxu0 0.0
    %1192 = vmatpush2.msra.mxu0 0.0
    %1193 = vmatprep.subr.mxu0 0.0
    %1194 = vmatpush2.msra.mxu0 0.0
    %1195 = vmatprep.subr.mxu0 0.0
    %1196 = vmatpush2.msra.mxu0 0.0
    %1197 = vmatprep.subr.mxu0 0.0
    %1198 = vmatpush2.msra.mxu0 0.0
    %1199 = vmatprep.mubr.f32.mxu0 0.0
    %1200 = vmatmul.mubr.f32.gmra.mxu0 %v1130
    %v1201 = vpop.f32.mrf.mxu0
    %v1202 = vadd.f32 %v1128, %v1201
    %v1203 = vpop.f32.mrf.mxu0
    %1204 = vmatprep.mubr.f32.mxu0 0.0
    %1205 = vmatmul.mubr.f32.gmra.mxu0 %v1133
    %v1206 = vpop.f32.mrf.mxu0
    %v1207 = vadd.f32 %v1128, %v1206
    %v1208 = vpop.f32.mrf.mxu0
    %1209 = vdwg.mxu0
    %v1210 = vmul.f32 %v1202, 0.5
    %v1211 = vmul.f32 %v1207, 0.5
    %v1212 = vmul.f32 %v1202, 0.044715
    %v1213 = vmul.f32 %v1207, 0.044715
    %v1214 = vmul.f32 %v1212, %v1202
    %v1215 = vmul.f32 %v1213, %v1207
    %v1216 = vmul.f32 %v1214, %v1202
    %v1217 = vmul.f32 %v1215, %v1207
    %v1218 = vadd.f32 %v1202, %v1216
    %v1219 = vadd.f32 %v1207, %v1217
    %v1220 = vmul.f32 %v1218, 0.7978846
    %v1221 = vmul.f32 %v1219, 0.7978846
    %v1222 = vtanh.pop %v1220
    %v1223 = vtanh.pop %v1221
    %v1224 = vadd.f32 %v1222, 1.0
    %v1225 = vadd.f32 %v1223, 1.0
    %v1226 = vmul.f32 %v1210, %v1224
    %v1227 = vmul.f32 %v1211, %v1225
    %v1228 = vld [vmem:[%s6] sm:$0xff]
    %v1229 = vld [vmem:[%s6 + $0x8] sm:$0xff]
    %v1230 = vld [vmem:[%s6 + $0x10] sm:$0xff]
    %v1231 = vld [vmem:[%s6 + $0x18] sm:$0xff]
    %v1232 = vld [vmem:[%s6 + $0x20] sm:$0xff]
    %v1233 = vld [vmem:[%s6 + $0x28] sm:$0xff]
    %v1234 = vld [vmem:[%s6 + $0x30] sm:$0xff]
    %v1235 = vld [vmem:[%s6 + $0x38] sm:$0xff]
    %v1236 = vlaneseq
    %v1237 = vshrl.u32 %v1236, 7
    %v1238 = vsub.s32 7, %v1237
    %v1239 = vrot.slane %v90, %v1238
    %vm1240 = vcmask 523264
    %v1242 = vsel %vm1240, %v1226, 0
    %v1245 = vsel %vm1240, %v1227, 0
    %1247 = vmatprep.subr.mxu0 0.0
    %1248 = vmatpush1.msra.mxu0 0.0
    %1249 = vmatprep.subr.mxu0 0.0
    %1250 = vmatpush1.msra.mxu0 0.0
    %1251 = vmatprep.subr.mxu0 0.0
    %1252 = vmatpush1.msra.mxu0 0.0
    %1253 = vmatprep.subr.mxu0 0.0
    %1254 = vmatpush1.msra.mxu0 0.0
    %1255 = vmatprep.subr.mxu0 0.0
    %1256 = vmatpush1.msra.mxu0 0.0
    %1257 = vmatprep.subr.mxu0 0.0
    %1258 = vmatpush1.msra.mxu0 0.0
    %1259 = vmatprep.subr.mxu0 0.0
    %1260 = vmatpush1.msra.mxu0 0.0
    %1261 = vmatprep.subr.mxu0 0.0
    %1262 = vmatpush1.msra.mxu0 0.0
    %1263 = vmatprep.subr.mxu0 0.0
    %1264 = vmatpush1.msra.mxu0 %v1235
    %1265 = vmatprep.subr.mxu0 0.0
    %1266 = vmatpush1.msra.mxu0 %v1234
    %1267 = vmatprep.subr.mxu0 0.0
    %1268 = vmatpush1.msra.mxu0 %v1233
    %1269 = vmatprep.subr.mxu0 0.0
    %1270 = vmatpush1.msra.mxu0 %v1232
    %1271 = vmatprep.subr.mxu0 0.0
    %1272 = vmatpush1.msra.mxu0 %v1231
    %1273 = vmatprep.subr.mxu0 0.0
    %1274 = vmatpush1.msra.mxu0 %v1230
    %1275 = vmatprep.subr.mxu0 0.0
    %1276 = vmatpush1.msra.mxu0 %v1229
    %1277 = vmatprep.subr.mxu0 0.0
    %1278 = vmatpush1.msra.mxu0 %v1228
    %1279 = vmatprep.subr.mxu0 0.0
    %1280 = vmatpush2.msra.mxu0 0.0
    %1281 = vmatprep.subr.mxu0 0.0
    %1282 = vmatpush2.msra.mxu0 0.0
    %1283 = vmatprep.subr.mxu0 0.0
    %1284 = vmatpush2.msra.mxu0 0.0
    %1285 = vmatprep.subr.mxu0 0.0
    %1286 = vmatpush2.msra.mxu0 0.0
    %1287 = vmatprep.subr.mxu0 0.0
    %1288 = vmatpush2.msra.mxu0 0.0
    %1289 = vmatprep.subr.mxu0 0.0
    %1290 = vmatpush2.msra.mxu0 0.0
    %1291 = vmatprep.subr.mxu0 0.0
    %1292 = vmatpush2.msra.mxu0 0.0
    %1293 = vmatprep.subr.mxu0 0.0
    %1294 = vmatpush2.msra.mxu0 0.0
    %1295 = vmatprep.subr.mxu0 0.0
    %1296 = vmatpush2.msra.mxu0 0.0
    %1297 = vmatprep.subr.mxu0 0.0
    %1298 = vmatpush2.msra.mxu0 0.0
    %1299 = vmatprep.subr.mxu0 0.0
    %1300 = vmatpush2.msra.mxu0 0.0
    %1301 = vmatprep.subr.mxu0 0.0
    %1302 = vmatpush2.msra.mxu0 0.0
    %1303 = vmatprep.subr.mxu0 0.0
    %1304 = vmatpush2.msra.mxu0 0.0
    %1305 = vmatprep.subr.mxu0 0.0
    %1306 = vmatpush2.msra.mxu0 0.0
    %1307 = vmatprep.subr.mxu0 0.0
    %1308 = vmatpush2.msra.mxu0 0.0
    %1309 = vmatprep.subr.mxu0 0.0
    %1310 = vmatpush2.msra.mxu0 0.0
    %1311 = vmatprep.mubr.f32.mxu0 0.0
    %1312 = vmatmul.mubr.f32.gmra.mxu0 %v1242
    %v1313 = vpop.f32.mrf.mxu0
    %v1314 = vadd.f32 %v1239, %v1313
    %v1315 = vpop.f32.mrf.mxu0
    %1316 = vmatprep.mubr.f32.mxu0 0.0
    %1317 = vmatmul.mubr.f32.gmra.mxu0 %v1245
    %v1318 = vpop.f32.mrf.mxu0
    %v1319 = vadd.f32 %v1239, %v1318
    %v1320 = vpop.f32.mrf.mxu0
    %1321 = vdwg.mxu0
    %v1322 = vadd.f32 %v1119, %v1314
    %v1323 = vadd.f32 %v1120, %v1319
    %v1324 = vsel %vm104, %v1322, 0.0
    %1325 = vadd.xlane.f32.xlu0 %v1324
    %v1326 = vpop.xlane.xlu0 %1325
    %v1327 = vsel %vm104, %v1323, 0.0
    %1328 = vadd.xlane.f32.xlu0 %v1327
    %v1329 = vpop.xlane.xlu0 %1328
    %v1330 = vmul.f32 %v1326, %v111
    %v1331 = vmul.f32 %v1329, %v111
    %v1332 = vsub.f32 %v1322, %v1330
    %v1333 = vsub.f32 %v1323, %v1331
    %v1334 = vmul.f32 %v1332, %v1332
    %v1335 = vmul.f32 %v1333, %v1333
    %v1336 = vsel %vm104, %v1334, 0.0
    %1337 = vadd.xlane.f32.xlu0 %v1336
    %v1338 = vpop.xlane.xlu0 %1337
    %v1339 = vsel %vm104, %v1335, 0.0
    %1340 = vadd.xlane.f32.xlu0 %v1339
    %v1341 = vpop.xlane.xlu0 %1340
    %v1342 = vmul.f32 %v1338, %v111
    %v1343 = vmul.f32 %v1341, %v111
    %v1344 = vadd.f32 %v1342, 1e-12
    %v1345 = vadd.f32 %v1343, 1e-12
    %v1346 = vrsqrt.pop %v1344
    %v1347 = vrsqrt.pop %v1345
    %v1348 = vmul.f32 %v1332, %v1346
    %v1349 = vmul.f32 %v1333, %v1347
    %v1350 = vlaneseq
    %v1351 = vshrl.u32 %v1350, 7
    %v1352 = vsub.s32 0, %v1351
    %v1353 = vrot.slane %v91, %v1352
    %v1354 = vmul.f32 %v1348, %v1353
    %v1355 = vmul.f32 %v1349, %v1353
    %v1356 = vlaneseq
    %v1357 = vshrl.u32 %v1356, 7
    %v1358 = vsub.s32 1, %v1357
    %v1359 = vrot.slane %v91, %v1358
    %v1360 = vadd.f32 %v1354, %v1359
    %v1361 = vadd.f32 %v1355, %v1359
    %v1363 = vrot.slane %v1361, 7
    %vm1365 = vcmask 1040384
    %v1366 = vsel %vm1365, %v1360, %v1363
    %v1367 = vld [vmem:[#allocation9] sm:$0xff]
    %v1368 = vld [vmem:[#allocation9 + $0x8] sm:$0xff]
    %v1369 = vld [vmem:[#allocation9 + $0x10] sm:$0xff]
    %v1370 = vld [vmem:[#allocation9 + $0x18] sm:$0xff]
    %v1371 = vlaneseq
    %v1372 = vshrl.u32 %v1371, 7
    %v1373 = vsub.s32 2, %v1372
    %v1374 = vrot.slane %v91, %v1373
    %v1376 = vsel %vm104, %v1366, 0
    %1378 = vmatprep.subr.mxu0 0.0
    %1379 = vmatpush1.msra.mxu0 0.0
    %1380 = vmatprep.subr.mxu0 0.0
    %1381 = vmatpush1.msra.mxu0 0.0
    %1382 = vmatprep.subr.mxu0 0.0
    %1383 = vmatpush1.msra.mxu0 0.0
    %1384 = vmatprep.subr.mxu0 0.0
    %1385 = vmatpush1.msra.mxu0 0.0
    %1386 = vmatprep.subr.mxu0 0.0
    %1387 = vmatpush1.msra.mxu0 0.0
    %1388 = vmatprep.subr.mxu0 0.0
    %1389 = vmatpush1.msra.mxu0 0.0
    %1390 = vmatprep.subr.mxu0 0.0
    %1391 = vmatpush1.msra.mxu0 0.0
    %1392 = vmatprep.subr.mxu0 0.0
    %1393 = vmatpush1.msra.mxu0 0.0
    %1394 = vmatprep.subr.mxu0 0.0
    %1395 = vmatpush1.msra.mxu0 0.0
    %1396 = vmatprep.subr.mxu0 0.0
    %1397 = vmatpush1.msra.mxu0 0.0
    %1398 = vmatprep.subr.mxu0 0.0
    %1399 = vmatpush1.msra.mxu0 0.0
    %1400 = vmatprep.subr.mxu0 0.0
    %1401 = vmatpush1.msra.mxu0 0.0
    %1402 = vmatprep.subr.mxu0 0.0
    %1403 = vmatpush1.msra.mxu0 %v1370
    %1404 = vmatprep.subr.mxu0 0.0
    %1405 = vmatpush1.msra.mxu0 %v1369
    %1406 = vmatprep.subr.mxu0 0.0
    %1407 = vmatpush1.msra.mxu0 %v1368
    %1408 = vmatprep.subr.mxu0 0.0
    %1409 = vmatpush1.msra.mxu0 %v1367
    %1410 = vmatprep.subr.mxu0 0.0
    %1411 = vmatpush2.msra.mxu0 0.0
    %1412 = vmatprep.subr.mxu0 0.0
    %1413 = vmatpush2.msra.mxu0 0.0
    %1414 = vmatprep.subr.mxu0 0.0
    %1415 = vmatpush2.msra.mxu0 0.0
    %1416 = vmatprep.subr.mxu0 0.0
    %1417 = vmatpush2.msra.mxu0 0.0
    %1418 = vmatprep.subr.mxu0 0.0
    %1419 = vmatpush2.msra.mxu0 0.0
    %1420 = vmatprep.subr.mxu0 0.0
    %1421 = vmatpush2.msra.mxu0 0.0
    %1422 = vmatprep.subr.mxu0 0.0
    %1423 = vmatpush2.msra.mxu0 0.0
    %1424 = vmatprep.subr.mxu0 0.0
    %1425 = vmatpush2.msra.mxu0 0.0
    %1426 = vmatprep.subr.mxu0 0.0
    %1427 = vmatpush2.msra.mxu0 0.0
    %1428 = vmatprep.subr.mxu0 0.0
    %1429 = vmatpush2.msra.mxu0 0.0
    %1430 = vmatprep.subr.mxu0 0.0
    %1431 = vmatpush2.msra.mxu0 0.0
    %1432 = vmatprep.subr.mxu0 0.0
    %1433 = vmatpush2.msra.mxu0 0.0
    %1434 = vmatprep.subr.mxu0 0.0
    %1435 = vmatpush2.msra.mxu0 0.0
    %1436 = vmatprep.subr.mxu0 0.0
    %1437 = vmatpush2.msra.mxu0 0.0
    %1438 = vmatprep.subr.mxu0 0.0
    %1439 = vmatpush2.msra.mxu0 0.0
    %1440 = vmatprep.subr.mxu0 0.0
    %1441 = vmatpush2.msra.mxu0 0.0
    %1442 = vmatprep.mubr.f32.mxu0 0.0
    %1443 = vmatmul.mubr.f32.gmra.mxu0 %v1376
    %v1444 = vpop.f32.mrf.mxu0
    %v1445 = vadd.f32 %v1374, %v1444
    %v1446 = vpop.f32.mrf.mxu0
    %1447 = vdwg.mxu0
    %v1448 = vtanh.pop %v1445
    %v1449 = vld [vmem:[#allocation10] sm:$0xff]
    %v1450 = vld [vmem:[#allocation10 + $0x8] sm:$0xff]
    %v1451 = vld [vmem:[#allocation10 + $0x10] sm:$0xff]
    %v1452 = vld [vmem:[#allocation10 + $0x18] sm:$0xff]
    %v1453 = vlaneseq
    %v1454 = vshrl.u32 %v1453, 7
    %v1455 = vsub.s32 3, %v1454
    %v1456 = vrot.slane %v91, %v1455
    %v1458 = vsel %vm104, %v1448, 0
    %1460 = vmatprep.subr.mxu0 0.0
    %1461 = vmatpush1.msra.mxu0 0.0
    %1462 = vmatprep.subr.mxu0 0.0
    %1463 = vmatpush1.msra.mxu0 0.0
    %1464 = vmatprep.subr.mxu0 0.0
    %1465 = vmatpush1.msra.mxu0 0.0
    %1466 = vmatprep.subr.mxu0 0.0
    %1467 = vmatpush1.msra.mxu0 0.0
    %1468 = vmatprep.subr.mxu0 0.0
    %1469 = vmatpush1.msra.mxu0 0.0
    %1470 = vmatprep.subr.mxu0 0.0
    %1471 = vmatpush1.msra.mxu0 0.0
    %1472 = vmatprep.subr.mxu0 0.0
    %1473 = vmatpush1.msra.mxu0 0.0
    %1474 = vmatprep.subr.mxu0 0.0
    %1475 = vmatpush1.msra.mxu0 0.0
    %1476 = vmatprep.subr.mxu0 0.0
    %1477 = vmatpush1.msra.mxu0 0.0
    %1478 = vmatprep.subr.mxu0 0.0
    %1479 = vmatpush1.msra.mxu0 0.0
    %1480 = vmatprep.subr.mxu0 0.0
    %1481 = vmatpush1.msra.mxu0 0.0
    %1482 = vmatprep.subr.mxu0 0.0
    %1483 = vmatpush1.msra.mxu0 0.0
    %1484 = vmatprep.subr.mxu0 0.0
    %1485 = vmatpush1.msra.mxu0 %v1452
    %1486 = vmatprep.subr.mxu0 0.0
    %1487 = vmatpush1.msra.mxu0 %v1451
    %1488 = vmatprep.subr.mxu0 0.0
    %1489 = vmatpush1.msra.mxu0 %v1450
    %1490 = vmatprep.subr.mxu0 0.0
    %1491 = vmatpush1.msra.mxu0 %v1449
    %1492 = vmatprep.subr.mxu0 0.0
    %1493 = vmatpush2.msra.mxu0 0.0
    %1494 = vmatprep.subr.mxu0 0.0
    %1495 = vmatpush2.msra.mxu0 0.0
    %1496 = vmatprep.subr.mxu0 0.0
    %1497 = vmatpush2.msra.mxu0 0.0
    %1498 = vmatprep.subr.mxu0 0.0
    %1499 = vmatpush2.msra.mxu0 0.0
    %1500 = vmatprep.subr.mxu0 0.0
    %1501 = vmatpush2.msra.mxu0 0.0
    %1502 = vmatprep.subr.mxu0 0.0
    %1503 = vmatpush2.msra.mxu0 0.0
    %1504 = vmatprep.subr.mxu0 0.0
    %1505 = vmatpush2.msra.mxu0 0.0
    %1506 = vmatprep.subr.mxu0 0.0
    %1507 = vmatpush2.msra.mxu0 0.0
    %1508 = vmatprep.subr.mxu0 0.0
    %1509 = vmatpush2.msra.mxu0 0.0
    %1510 = vmatprep.subr.mxu0 0.0
    %1511 = vmatpush2.msra.mxu0 0.0
    %1512 = vmatprep.subr.mxu0 0.0
    %1513 = vmatpush2.msra.mxu0 0.0
    %1514 = vmatprep.subr.mxu0 0.0
    %1515 = vmatpush2.msra.mxu0 0.0
    %1516 = vmatprep.subr.mxu0 0.0
    %1517 = vmatpush2.msra.mxu0 0.0
    %1518 = vmatprep.subr.mxu0 0.0
    %1519 = vmatpush2.msra.mxu0 0.0
    %1520 = vmatprep.subr.mxu0 0.0
    %1521 = vmatpush2.msra.mxu0 0.0
    %1522 = vmatprep.subr.mxu0 0.0
    %1523 = vmatpush2.msra.mxu0 0.0
    %1524 = vmatprep.mubr.f32.mxu0 0.0
    %1525 = vmatmul.mubr.f32.gmra.mxu0 %v1458
    %v1526 = vpop.f32.mrf.mxu0
    %v1527 = vadd.f32 %v1456, %v1526
    %v1528 = vpop.f32.mrf.mxu0
    %1529 = vdwg.mxu0
    %1530 = vst [vmem:[#allocation12] sm:$0x3] %v1527
    // Predicated region
    $region50: #{tpu_custom_call.1} parent=1 // pred_check
      _
    $region51: #{tpu_custom_call.1} parent=1 // pred_check_branch
      %1532 = sbr.rel (0) target = $region53
    $region52: #{tpu_custom_call.1} parent=1 // pred_region
      %s1534 = ssub.s32 32, 32
      %1535 = vsyncadd [#allocation6], %s1534
      %s1537 = sshll.u32 [#allocation12], 4
      %s1538 = int_to_ptr.vmem [resolvable:$true] %s1537
      %1540 = dma.vmem_to_hbm [thread:$0]  %s1538, 32, %s9, [#allocation6]
    $region53: #{tpu_custom_call.1} parent=1 // pred_fallthru
      _
    // Predicated region
    $region54: #{tpu_custom_call.1} parent=1 // pred_check
      _
    $region55: #{tpu_custom_call.1} parent=1 // pred_check_branch
      %1542 = sbr.rel (0) target = $region57
    $region56: #{tpu_custom_call.1} parent=1 // pred_region
      %1543 = dma.done [#allocation6], 32
    $region57: #{tpu_custom_call.1} parent=1 // pred_fallthru
      _
    %1544 = vsyncpa [#allocation5], 1
    %1545 = vsyncpa [#allocation8], 1
    %1546 = vsyncpa [#allocation11], 1
    %1547 = vsyncpa [#allocation6], 1

</llo_original>
